<compile_context>
chip_gen: v7x
topology: tpu7x:2x2x1
jax: 0.10.0
libtpu: 0.0.40
codegen_flags: <defaults>
</compile_context>

<pallas_src>
import functools

import jax
import jax.numpy as jnp
from jax import lax
from jax.experimental import pallas as pl
from jax.experimental.pallas import tpu as pltpu


_FEAT_BUF_BYTES = 8 * 1024 * 1024   # per feat VMEM buffer (double-buffered by Pallas)
_TILE_D_CAP = 512


def _round_up(x, m):
    return ((x + m - 1) // m) * m


def _pick_tile_d(d, cap=_TILE_D_CAP):
    """Largest multiple-of-128 divisor of d up to `cap`; full d if not 128-aligned."""
    if d % 128 != 0:
        return d          # block must cover the full (non-128-multiple) feature dim
    if d <= cap:
        return d
    t = (cap // 128) * 128
    while t >= 128:
        if d % t == 0:
            return t
        t -= 128
    return 128


def _avg_pool_kernel(feat_ref, seg_ref, out_ref, acc_ref, cnt_ref, *,
                     num_nodes, tile_n, num_graphs_padded, has_ragged_tile,
                     mxu_precision):
    """Segment mean. grid = (d_tiles, n_tiles); node axis (last) is the reduction."""
    t = pl.program_id(1)
    n_last = pl.num_programs(1) - 1

    @pl.when(t == 0)
    def _():
        acc_ref[...] = jnp.zeros_like(acc_ref)
        cnt_ref[...] = jnp.zeros_like(cnt_ref)

    # One-hot segment matrix, lane-dense along the node axis: (B_pad, tile_n).
    seg = seg_ref[...]                                             # (1, tile_n) int32
    graph_ids = lax.broadcasted_iota(jnp.int32, (num_graphs_padded, tile_n), 0)
    match = graph_ids == seg                                       # bool
    one_hot = match.astype(feat_ref.dtype)

    # Per-graph node counts: seg is padded with -1 past N in the wrapper, so OOB
    # columns never match and the counts are exact.  Re-accumulated per d-tile
    # (idempotent), which keeps the "parallel" d axis megacore-safe.
    cnt_ref[...] += jnp.sum(match.astype(jnp.float32), axis=1, keepdims=True)

    def accumulate(feat):
        # Single MXU contraction replaces a per-graph masked-sum VPU loop.
        acc_ref[...] += lax.dot_general(
            one_hot, feat,
            dimension_numbers=(((1,), (0,)), ((), ())),
            preferred_element_type=jnp.float32,
            precision=mxu_precision,
        )

    if not has_ragged_tile:
        accumulate(feat_ref[...])
    else:
        # Only the last node tile can read past N; mask its (undefined) OOB rows.
        @pl.when(t != n_last)
        def _():
            accumulate(feat_ref[...])

        @pl.when(t == n_last)
        def _():
            row = t * tile_n + lax.broadcasted_iota(jnp.int32, (tile_n, 1), 0)
            feat = jnp.where(row < num_nodes, feat_ref[...],
                             jnp.zeros((), feat_ref.dtype))
            accumulate(feat)

    @pl.when(t == n_last)
    def _():
        denom = jnp.maximum(cnt_ref[...], 1.0)     # empty graphs -> mean 0
        out_ref[...] = (acc_ref[...] / denom).astype(out_ref.dtype)


def avg_pooling(feat, seg_ids, num_graphs, *, tile_n=2048):
    """Graph average pooling (DGL mean_nodes) via a Pallas TPU kernel.

    feat:     (N, D) node features.
    seg_ids:  (N,)   int graph id per node, values in [0, num_graphs).
    returns:  (num_graphs, D) per-graph mean of node features, dtype of feat.
    """
    N, D = feat.shape
    b_pad = _round_up(max(int(num_graphs), 1), 8)

    tile_d = _pick_tile_d(D)
    d_tiles = pl.cdiv(D, tile_d)

    itemsize = jnp.dtype(feat.dtype).itemsize
    bytes_per_row = tile_d * itemsize
    budget_rows = max(128, ((_FEAT_BUF_BYTES // bytes_per_row) // 128) * 128)
    tile_n = max(128, (int(tile_n) // 128) * 128)
    tile_n = min(tile_n, budget_rows, _round_up(N, 128))
    n_tiles = pl.cdiv(N, tile_n)
    has_ragged_tile = (N % tile_n) != 0

    # Pad the (tiny) segment-id row to the grid-covered length with -1 so the
    # last seg block never reads undefined memory and counts stay exact.
    padded_len = n_tiles * tile_n
    seg_row = jnp.pad(seg_ids.astype(jnp.int32), (0, padded_len - N),
                      constant_values=-1).reshape(1, padded_len)

    # f32 feat needs full-precision MXU passes (one-hot sums must be exact to
    # ~1e-5); bf16 feat is already single-pass native.
    mxu_precision = (lax.Precision.HIGHEST
                     if jnp.dtype(feat.dtype) == jnp.dtype(jnp.float32)
                     else lax.Precision.DEFAULT)

    kernel = functools.partial(
        _avg_pool_kernel,
        num_nodes=N, tile_n=tile_n, num_graphs_padded=b_pad,
        has_ragged_tile=has_ragged_tile, mxu_precision=mxu_precision)

    # Scoped-VMEM request: double-buffered feat + seg + out, plus scratch,
    # with slack.  Typical configs land ~16-24 MiB (fits v7x's 64 MiB physical
    # and lifts v5e's 16 MiB scoped default).
    feat_tile_bytes = tile_n * tile_d * itemsize
    out_tile_bytes = b_pad * tile_d * itemsize
    seg_tile_bytes = 8 * tile_n * 4
    scratch_bytes = b_pad * tile_d * 4 + b_pad * 128 * 4
    vmem_limit = int(2 * feat_tile_bytes + 2 * out_tile_bytes
                     + 2 * seg_tile_bytes + scratch_bytes + (4 << 20))
    vmem_limit = max(vmem_limit, 16 << 20)
    vmem_limit = min(vmem_limit, 64 << 20)

    out = pl.pallas_call(
        kernel,
        out_shape=jax.ShapeDtypeStruct((b_pad, D), feat.dtype),
        grid_spec=pltpu.PrefetchScalarGridSpec(
            num_scalar_prefetch=0,
            grid=(d_tiles, n_tiles),
            in_specs=[
                pl.BlockSpec((tile_n, tile_d), lambda d, t: (t, d)),  # feat
                pl.BlockSpec((1, tile_n), lambda d, t: (0, t)),       # seg ids
            ],
            out_specs=pl.BlockSpec((b_pad, tile_d), lambda d, t: (0, d)),
            scratch_shapes=[
                pltpu.VMEM((b_pad, tile_d), jnp.float32),   # feature-sum accumulator
                pltpu.VMEM((b_pad, 1), jnp.float32),        # node-count accumulator
            ],
        ),
        compiler_params=pltpu.CompilerParams(
            dimension_semantics=("parallel", "arbitrary"),
            vmem_limit_bytes=vmem_limit,
        ),
    )(feat, seg_row)
    return out[:num_graphs]


if __name__ == "__main__":
    key = jax.random.PRNGKey(0)
    k1, k2 = jax.random.split(key)

    # --- Test 1: small batched graph (3 graphs: 7, 5, 8 nodes; D=32), f32. ---
    nodes_per_graph = [7, 5, 8]
    B = len(nodes_per_graph)
    N = sum(nodes_per_graph)
    D = 32
    feat = jax.random.normal(k1, (N, D), dtype=jnp.float32)
    seg = jnp.repeat(jnp.arange(B, dtype=jnp.int32),
                     jnp.array(nodes_per_graph), total_repeat_length=N)

    out = jax.block_until_ready(avg_pooling(feat, seg, B))
    counts = jnp.array(nodes_per_graph, dtype=jnp.float32)[:, None]
    ref = jax.ops.segment_sum(feat, seg, num_segments=B) / counts
    assert out.shape == (B, D) and out.dtype == feat.dtype
    assert jnp.allclose(out, ref, atol=1e-5, rtol=1e-5)

    # --- Test 2: larger ragged case (D=384 -> single d pass, ragged node tile). ---
    N2, D2, B2 = 1000, 384, 5
    feat2 = jax.random.normal(k2, (N2, D2), dtype=jnp.float32)
    seg2 = jax.random.randint(jax.random.PRNGKey(1), (N2,), 0, B2, dtype=jnp.int32)
    out2 = jax.block_until_ready(avg_pooling(feat2, seg2, B2))
    cnt2 = jax.ops.segment_sum(jnp.ones((N2,), jnp.float32), seg2, num_segments=B2)
    ref2 = (jax.ops.segment_sum(feat2, seg2, num_segments=B2)
            / jnp.maximum(cnt2, 1.0)[:, None])
    assert jnp.allclose(out2, ref2, atol=1e-4, rtol=1e-4)

    # --- Test 3: bf16 feat path (DEFAULT MXU precision; f32 accumulation). ---
    feat3 = feat2.astype(jnp.bfloat16)
    out3 = jax.block_until_ready(avg_pooling(feat3, seg2, B2))
    ref3 = (jax.ops.segment_sum(feat3.astype(jnp.float32), seg2, num_segments=B2)
            / jnp.maximum(cnt2, 1.0)[:, None])
    assert out3.dtype == jnp.bfloat16
    assert jnp.allclose(out3.astype(jnp.float32), ref3, atol=2e-2, rtol=2e-2)

    # --- Test 4: node count that tiles evenly (static skip of the ragged mask)
    #     and multiple node tiles exercising the accumulator path. ---
    N4, D4, B4 = 4096, 256, 7
    feat4 = jax.random.normal(jax.random.PRNGKey(2), (N4, D4), dtype=jnp.float32)
    seg4 = jax.random.randint(jax.random.PRNGKey(3), (N4,), 0, B4, dtype=jnp.int32)
    out4 = jax.block_until_ready(avg_pooling(feat4, seg4, B4, tile_n=1024))
    cnt4 = jax.ops.segment_sum(jnp.ones((N4,), jnp.float32), seg4, num_segments=B4)
    ref4 = (jax.ops.segment_sum(feat4, seg4, num_segments=B4)
            / jnp.maximum(cnt4, 1.0)[:, None])
    assert jnp.allclose(out4, ref4, atol=1e-4, rtol=1e-4)

    print("KERNEL_OK")
</pallas_src>

<mosaic_0001>
module attributes {stable_mosaic.version = 11 : i64} {
  func.func @_avg_pool_kernel(%arg0: i32, %arg1: i32, %arg2: memref<128x32xf32, #tpu.memory_space<vmem>>, %arg3: memref<1x128xi32, #tpu.memory_space<vmem>>, %arg4: memref<8x32xf32, #tpu.memory_space<vmem>>, %arg5: memref<8x32xf32, #tpu.memory_space<vmem>>, %arg6: memref<8x1xf32, #tpu.memory_space<vmem>>) attributes {dimension_semantics = [#tpu.dimension_semantics<parallel>, #tpu.dimension_semantics<arbitrary>], iteration_bounds = array<i64: 1, 1>, scalar_prefetch = 0 : i64, scratch_operands = 2 : i64, tpu.core_type = #tpu.core_type<tc>, window_params = [{transform_indices = @transform_0, window_bounds = array<i64: 128, 32>}, {transform_indices = @transform_1, window_bounds = array<i64: 1, 128>}, {transform_indices = @transform_2, window_bounds = array<i64: 8, 32>}]} {
    %c0_i32 = arith.constant 0 : i32
    %0 = arith.cmpi eq, %arg1, %c0_i32 : i32
    %1 = arith.extui %0 : i1 to i32
    %c0_i32_0 = arith.constant 0 : i32
    %2 = arith.cmpi ne, %1, %c0_i32_0 : i32
    scf.if %2 {
      %cst_12 = arith.constant 0.000000e+00 : f32
      %25 = vector.broadcast %cst_12 : f32 to vector<8x32xf32>
      %c0_13 = arith.constant 0 : index
      %c0_14 = arith.constant 0 : index
      %26 = vector.load %arg5[%c0_13, %c0_14] : memref<8x32xf32, #tpu.memory_space<vmem>>, vector<8x32xf32>
      tpu.vector_store %arg5[%c0_13, %c0_14], %25 {strides = array<i32>} : memref<8x32xf32, #tpu.memory_space<vmem>>, vector<8x32xf32>,
      %cst_15 = arith.constant 0.000000e+00 : f32
      %27 = vector.broadcast %cst_15 : f32 to vector<8x1xf32>
      %c0_16 = arith.constant 0 : index
      %c0_17 = arith.constant 0 : index
      %28 = vector.load %arg6[%c0_16, %c0_17] : memref<8x1xf32, #tpu.memory_space<vmem>>, vector<8x1xf32>
      tpu.vector_store %arg6[%c0_16, %c0_17], %27 {strides = array<i32>} : memref<8x1xf32, #tpu.memory_space<vmem>>, vector<8x1xf32>,
    } else {
    }
    %c0 = arith.constant 0 : index
    %c0_1 = arith.constant 0 : index
    %3 = vector.load %arg3[%c0, %c0_1] : memref<1x128xi32, #tpu.memory_space<vmem>>, vector<1x128xi32>
    %4 = tpu.iota {dimensions = array<i32: 0>} : vector<8x128xi32>
    %5 = vector.broadcast %3 : vector<1x128xi32> to vector<8x128xi32>
    %6 = arith.cmpi eq, %4, %5 : vector<8x128xi32>
    %7 = arith.extui %6 : vector<8x128xi1> to vector<8x128xi32>
    %8 = arith.sitofp %7 : vector<8x128xi32> to vector<8x128xf32>
    %c0_2 = arith.constant 0 : index
    %c0_3 = arith.constant 0 : index
    %9 = vector.load %arg6[%c0_2, %c0_3] : memref<8x1xf32, #tpu.memory_space<vmem>>, vector<8x1xf32>
    %10 = arith.extui %6 : vector<8x128xi1> to vector<8x128xi32>
    %11 = arith.sitofp %10 : vector<8x128xi32> to vector<8x128xf32>
    %cst = arith.constant dense<0.000000e+00> : vector<8xf32>
    %12 = vector.multi_reduction <add>, %11, %cst [1] : vector<8x128xf32> to vector<8xf32>
    %13 = vector.shape_cast %12 : vector<8xf32> to vector<8x1xf32>
    %14 = arith.addf %9, %13 : vector<8x1xf32>
    %c0_4 = arith.constant 0 : index
    %c0_5 = arith.constant 0 : index
    %15 = vector.load %arg6[%c0_4, %c0_5] : memref<8x1xf32, #tpu.memory_space<vmem>>, vector<8x1xf32>
    tpu.vector_store %arg6[%c0_4, %c0_5], %14 {strides = array<i32>} : memref<8x1xf32, #tpu.memory_space<vmem>>, vector<8x1xf32>,
    %c0_i32_6 = arith.constant 0 : i32
    %16 = arith.cmpi ne, %arg1, %c0_i32_6 : i32
    %17 = arith.extui %16 : i1 to i32
    %c0_i32_7 = arith.constant 0 : i32
    %18 = arith.cmpi ne, %17, %c0_i32_7 : i32
    scf.if %18 {
      %c0_12 = arith.constant 0 : index
      %c0_13 = arith.constant 0 : index
      %25 = vector.load %arg2[%c0_12, %c0_13] : memref<128x32xf32, #tpu.memory_space<vmem>>, vector<128x32xf32>
      %c0_14 = arith.constant 0 : index
      %c0_15 = arith.constant 0 : index
      %26 = vector.load %arg5[%c0_14, %c0_15] : memref<8x32xf32, #tpu.memory_space<vmem>>, vector<8x32xf32>
      %cst_16 = arith.constant dense<0.000000e+00> : vector<8x32xf32>
      %27 = tpu.matmul %8, %25, %cst_16 {dimension_numbers = #tpu.dot_dimension_numbers<[1], [0], [0], [1], [0, 0, 1, 1], [], []>, precision = #tpu.contract_precision<fp32>} : vector<8x128xf32>, vector<128x32xf32>, vector<8x32xf32> -> vector<8x32xf32>
      %28 = arith.addf %26, %27 : vector<8x32xf32>
      %c0_17 = arith.constant 0 : index
      %c0_18 = arith.constant 0 : index
      %29 = vector.load %arg5[%c0_17, %c0_18] : memref<8x32xf32, #tpu.memory_space<vmem>>, vector<8x32xf32>
      tpu.vector_store %arg5[%c0_17, %c0_18], %28 {strides = array<i32>} : memref<8x32xf32, #tpu.memory_space<vmem>>, vector<8x32xf32>,
    } else {
    }
    %c0_i32_8 = arith.constant 0 : i32
    %19 = arith.cmpi eq, %arg1, %c0_i32_8 : i32
    %20 = arith.extui %19 : i1 to i32
    %c0_i32_9 = arith.constant 0 : i32
    %21 = arith.cmpi ne, %20, %c0_i32_9 : i32
    scf.if %21 {
      %c128_i32 = arith.constant 128 : i32
      %25 = arith.muli %arg1, %c128_i32 : i32
      %26 = tpu.iota {dimensions = array<i32: 0>} : vector<128x1xi32>
      %27 = vector.broadcast %25 : i32 to vector<128x1xi32>
      %28 = arith.addi %27, %26 : vector<128x1xi32>
      %c20_i32 = arith.constant 20 : i32
      %29 = vector.broadcast %c20_i32 : i32 to vector<128x1xi32>
      %30 = arith.cmpi slt, %28, %29 : vector<128x1xi32>
      %c0_12 = arith.constant 0 : index
      %c0_13 = arith.constant 0 : index
      %31 = vector.load %arg2[%c0_12, %c0_13] : memref<128x32xf32, #tpu.memory_space<vmem>>, vector<128x32xf32>
      %cst_14 = arith.constant 0.000000e+00 : f32
      %32 = vector.shape_cast %30 : vector<128x1xi1> to vector<128x1xi1>
      %33 = vector.broadcast %32 : vector<128x1xi1> to vector<128x32xi1>
      %34 = vector.broadcast %cst_14 : f32 to vector<128x32xf32>
      %35 = arith.select %33, %31, %34 : vector<128x32xi1>, vector<128x32xf32>
      %c0_15 = arith.constant 0 : index
      %c0_16 = arith.constant 0 : index
      %36 = vector.load %arg5[%c0_15, %c0_16] : memref<8x32xf32, #tpu.memory_space<vmem>>, vector<8x32xf32>
      %cst_17 = arith.constant dense<0.000000e+00> : vector<8x32xf32>
      %37 = tpu.matmul %8, %35, %cst_17 {dimension_numbers = #tpu.dot_dimension_numbers<[1], [0], [0], [1], [0, 0, 1, 1], [], []>, precision = #tpu.contract_precision<fp32>} : vector<8x128xf32>, vector<128x32xf32>, vector<8x32xf32> -> vector<8x32xf32>
      %38 = arith.addf %36, %37 : vector<8x32xf32>
      %c0_18 = arith.constant 0 : index
      %c0_19 = arith.constant 0 : index
      %39 = vector.load %arg5[%c0_18, %c0_19] : memref<8x32xf32, #tpu.memory_space<vmem>>, vector<8x32xf32>
      tpu.vector_store %arg5[%c0_18, %c0_19], %38 {strides = array<i32>} : memref<8x32xf32, #tpu.memory_space<vmem>>, vector<8x32xf32>,
    } else {
    }
    %c0_i32_10 = arith.constant 0 : i32
    %22 = arith.cmpi eq, %arg1, %c0_i32_10 : i32
    %23 = arith.extui %22 : i1 to i32
    %c0_i32_11 = arith.constant 0 : i32
    %24 = arith.cmpi ne, %23, %c0_i32_11 : i32
    scf.if %24 {
      %c0_12 = arith.constant 0 : index
      %c0_13 = arith.constant 0 : index
      %25 = vector.load %arg6[%c0_12, %c0_13] : memref<8x1xf32, #tpu.memory_space<vmem>>, vector<8x1xf32>
      %cst_14 = arith.constant 1.000000e+00 : f32
      %26 = vector.broadcast %cst_14 : f32 to vector<8x1xf32>
      %27 = arith.maximumf %25, %26 : vector<8x1xf32>
      %c0_15 = arith.constant 0 : index
      %c0_16 = arith.constant 0 : index
      %28 = vector.load %arg5[%c0_15, %c0_16] : memref<8x32xf32, #tpu.memory_space<vmem>>, vector<8x32xf32>
      %29 = vector.broadcast %27 : vector<8x1xf32> to vector<8x32xf32>
      %30 = arith.divf %28, %29 : vector<8x32xf32>
      %c0_17 = arith.constant 0 : index
      %c0_18 = arith.constant 0 : index
      %31 = vector.load %arg4[%c0_17, %c0_18] : memref<8x32xf32, #tpu.memory_space<vmem>>, vector<8x32xf32>
      tpu.vector_store %arg4[%c0_17, %c0_18], %30 {strides = array<i32>} : memref<8x32xf32, #tpu.memory_space<vmem>>, vector<8x32xf32>,
    } else {
    }
    return
  }
  func.func @transform_0(%arg0: i32, %arg1: i32) -> (i32, i32) {
    %c0_i32 = arith.constant 0 : i32
    return %arg1, %arg0 : i32, i32
  }
  func.func @transform_1(%arg0: i32, %arg1: i32) -> (i32, i32) {
    %c0_i32 = arith.constant 0 : i32
    %c0_i32_0 = arith.constant 0 : i32
    return %c0_i32, %arg1 : i32, i32
  }
  func.func @transform_2(%arg0: i32, %arg1: i32) -> (i32, i32) {
    %c0_i32 = arith.constant 0 : i32
    %c0_i32_0 = arith.constant 0 : i32
    return %c0_i32, %arg0 : i32, i32
  }
}

</mosaic_0001>

<llo_original>
// kernel: tpu_custom_call.1
$region0: #{tpu_custom_call.1}
  #allocation0 [shape = 'u32[]', space=smem, size = 0x4, offset = 0x4, fixed_abs, tag = 'smem constant byte address 0x4 - core index']
  #allocation1 [shape = 'u32[144,128]{1,0:T(1,128)}', space=vmem, size = 0x12000, scoped, tag = 'internal scratch']
  #allocation2 [shape = 'f32[8,32]{1,0:T(8,128)}', space=vmem, size = 0x1000, scoped, tag = 'scratch operand']
  #allocation3 [shape = 'f32[8,1]{1,0:T(8,128)}', space=vmem, size = 0x1000, scoped, tag = 'scratch operand']
  %s0 = inlined_call_operand.hbm [shape: f32[20,32], index: 0, kind: input, shape index: {}]
  %s1 = inlined_call_operand.vmem [shape: s32[1,128], index: 1, kind: input, shape index: {}]
  %s2 = inlined_call_operand.hbm [shape: f32[8,32], index: 2, kind: output, shape index: {}]
  %s3 = sld [smem:[#allocation0]]
  $region34: #{tpu_custom_call.1} parent=0
    _
  %s5 = ssub.s32 1, %s3
  %s6 = scalar_select 0, %s5, %s3
  $region1: #{tpu_custom_call.1} parent=0
    #allocation4 [shape = 'u8[65536]{0}', space=vmem, size = 0x10000, scoped, tag = 'input window, operand 0, single buffered']
    #allocation5 [shape = 's32[1]{0}', space=sflag, size = 0x4, scoped, tag = 'scoped memory for tpu_custom_call.1']
    #allocation6 [shape = 's32[1]{0}', space=sflag, size = 0x4, scoped, tag = 'scoped memory for tpu_custom_call.1']
    #allocation7 [shape = 'u8[4096]{0}', space=vmem, size = 0x1000, scoped, tag = 'output window, operand 0, single buffered']
    %7 = vsyncpa [#allocation5], 0
    %8 = vsyncpa [#allocation6], 0
    // Predicated region
    $region2: #{tpu_custom_call.1} parent=1 // pred_check
      _
    $region3: #{tpu_custom_call.1} parent=1 // pred_check_branch
      %10 = sbr.rel (0) target = $region5
    $region4: #{tpu_custom_call.1} parent=1 // pred_region
      %s12 = ssub.s32 2048, 384
      %13 = vsyncadd [#allocation5], %s12
      %s14 = sshll.u32 [#allocation4], 4
      %s15 = int_to_ptr.vmem [resolvable:$true] %s14
      %20 = dma.hbm_to_vmem [thread:$0]  %s0, 384, %s15, [#allocation5], 128, 128, 8
    $region5: #{tpu_custom_call.1} parent=1 // pred_fallthru
      _
    // Predicated region
    $region6: #{tpu_custom_call.1} parent=1 // pred_check
      _
    $region7: #{tpu_custom_call.1} parent=1 // pred_check_branch
      %22 = sbr.rel (0) target = $region9
    $region8: #{tpu_custom_call.1} parent=1 // pred_region
      _
    $region9: #{tpu_custom_call.1} parent=1 // pred_fallthru
      _
    // Predicated region
    $region10: #{tpu_custom_call.1} parent=1 // pred_check
      _
    $region11: #{tpu_custom_call.1} parent=1 // pred_check_branch
      %24 = sbr.rel (0) target = $region13
    $region12: #{tpu_custom_call.1} parent=1 // pred_region
      %25 = dma.done [#allocation5], 2048
    $region13: #{tpu_custom_call.1} parent=1 // pred_fallthru
      _
    %p26 = scmp.eq.s32.totalorder 0, 0
    // Predicated region
    $region14: #{tpu_custom_call.1} parent=1 // pred_check
      %p27 = pneg %p26
    $region15: #{tpu_custom_call.1} parent=1 // pred_check_branch
      %29 = sbr.rel (%p27) target = $region17
    $region16: #{tpu_custom_call.1} parent=1 // pred_region
      %vm30 = vcmask 261120
      %31 = vst.msk [vmem:[#allocation2] sm:$0xff] %vm30, 0.0
      %vm32 = vcmask 7168
      %33 = vst.msk [vmem:[#allocation3] sm:$0xff] %vm32, 0.0
    $region17: #{tpu_custom_call.1} parent=1 // pred_fallthru
      _
    %v34 = vld [vmem:[%s1] sm:$0x1]
    %v35 = vlaneseq
    %v36 = vshrl.u32 %v35, 7
    %v37 = vlaneseq
    %v38 = vshrl.u32 %v37, 7
    %v39 = vsub.s32 0, %v38
    %v40 = vrot.slane %v34, %v39
    %vm41 = vcmp.eq.s32.totalorder %v36, %v40
    %v42 = vsel %vm41, 1, 0
    %v43 = vcvt.s32.f32 %v42
    %v44 = vld [vmem:[#allocation3] sm:$0xff]
    %45 = vadd.xlane.f32.xlu0 %v43
    %v46 = vpop.xlane.xlu0 %45
    %v47 = vadd.f32 %v44, %v46
    %vm48 = vcmask 7168
    %49 = vst.msk [vmem:[#allocation3] sm:$0xff] %vm48, %v47
    %p50 = scmp.ne.s32.totalorder 0, 0
    // Predicated region
    $region18: #{tpu_custom_call.1} parent=1 // pred_check
      %p51 = pneg %p50
    $region19: #{tpu_custom_call.1} parent=1 // pred_check_branch
      %53 = sbr.rel (%p51) target = $region21
    $region20: #{tpu_custom_call.1} parent=1 // pred_region
      %v54 = vld [vmem:[#allocation4] sm:$0xff]
      %v55 = vld [vmem:[#allocation4 + $0x8] sm:$0xff]
      %v56 = vld [vmem:[#allocation4 + $0x10] sm:$0xff]
      %v57 = vld [vmem:[#allocation4 + $0x18] sm:$0xff]
      %v58 = vld [vmem:[#allocation4 + $0x20] sm:$0xff]
      %v59 = vld [vmem:[#allocation4 + $0x28] sm:$0xff]
      %v60 = vld [vmem:[#allocation4 + $0x30] sm:$0xff]
      %v61 = vld [vmem:[#allocation4 + $0x38] sm:$0xff]
      %v62 = vld [vmem:[#allocation4 + $0x40] sm:$0xff]
      %v63 = vld [vmem:[#allocation4 + $0x48] sm:$0xff]
      %v64 = vld [vmem:[#allocation4 + $0x50] sm:$0xff]
      %v65 = vld [vmem:[#allocation4 + $0x58] sm:$0xff]
      %v66 = vld [vmem:[#allocation4 + $0x60] sm:$0xff]
      %v67 = vld [vmem:[#allocation4 + $0x68] sm:$0xff]
      %v68 = vld [vmem:[#allocation4 + $0x70] sm:$0xff]
      %v69 = vld [vmem:[#allocation4 + $0x78] sm:$0xff]
      %v70 = vld [vmem:[#allocation2] sm:$0xff]
      %71 = vmatprep.subr.mxu0 0.0
      %v72 = vand.u32 %v54, 4294901760
      %73 = vmatpush1.msra.mxu0 %v72
      %74 = vmatprep.subr.mxu0 0.0
      %v75 = vand.u32 %v55, 4294901760
      %76 = vmatpush1.msra.mxu0 %v75
      %77 = vmatprep.subr.mxu0 0.0
      %v78 = vand.u32 %v56, 4294901760
      %79 = vmatpush1.msra.mxu0 %v78
      %80 = vmatprep.subr.mxu0 0.0
      %v81 = vand.u32 %v57, 4294901760
      %82 = vmatpush1.msra.mxu0 %v81
      %83 = vmatprep.subr.mxu0 0.0
      %v84 = vand.u32 %v58, 4294901760
      %85 = vmatpush1.msra.mxu0 %v84
      %86 = vmatprep.subr.mxu0 0.0
      %v87 = vand.u32 %v59, 4294901760
      %88 = vmatpush1.msra.mxu0 %v87
      %89 = vmatprep.subr.mxu0 0.0
      %v90 = vand.u32 %v60, 4294901760
      %91 = vmatpush1.msra.mxu0 %v90
      %92 = vmatprep.subr.mxu0 0.0
      %v93 = vand.u32 %v61, 4294901760
      %94 = vmatpush1.msra.mxu0 %v93
      %95 = vmatprep.subr.mxu0 0.0
      %v96 = vand.u32 %v62, 4294901760
      %97 = vmatpush1.msra.mxu0 %v96
      %98 = vmatprep.subr.mxu0 0.0
      %v99 = vand.u32 %v63, 4294901760
      %100 = vmatpush1.msra.mxu0 %v99
      %101 = vmatprep.subr.mxu0 0.0
      %v102 = vand.u32 %v64, 4294901760
      %103 = vmatpush1.msra.mxu0 %v102
      %104 = vmatprep.subr.mxu0 0.0
      %v105 = vand.u32 %v65, 4294901760
      %106 = vmatpush1.msra.mxu0 %v105
      %107 = vmatprep.subr.mxu0 0.0
      %v108 = vand.u32 %v66, 4294901760
      %109 = vmatpush1.msra.mxu0 %v108
      %110 = vmatprep.subr.mxu0 0.0
      %v111 = vand.u32 %v67, 4294901760
      %112 = vmatpush1.msra.mxu0 %v111
      %113 = vmatprep.subr.mxu0 0.0
      %v114 = vand.u32 %v68, 4294901760
      %115 = vmatpush1.msra.mxu0 %v114
      %116 = vmatprep.subr.mxu0 0.0
      %v117 = vand.u32 %v69, 4294901760
      %118 = vmatpush1.msra.mxu0 %v117
      %119 = vmatprep.subr.mxu0 0.0
      %120 = vmatpush1.msra.mxu0 0.0
      %121 = vmatprep.subr.mxu0 0.0
      %122 = vmatpush1.msra.mxu0 0.0
      %123 = vmatprep.subr.mxu0 0.0
      %124 = vmatpush1.msra.mxu0 0.0
      %125 = vmatprep.subr.mxu0 0.0
      %126 = vmatpush1.msra.mxu0 0.0
      %127 = vmatprep.subr.mxu0 0.0
      %128 = vmatpush1.msra.mxu0 0.0
      %129 = vmatprep.subr.mxu0 0.0
      %130 = vmatpush1.msra.mxu0 0.0
      %131 = vmatprep.subr.mxu0 0.0
      %132 = vmatpush1.msra.mxu0 0.0
      %133 = vmatprep.subr.mxu0 0.0
      %134 = vmatpush1.msra.mxu0 0.0
      %135 = vmatprep.subr.mxu0 0.0
      %136 = vmatpush1.msra.mxu0 0.0
      %137 = vmatprep.subr.mxu0 0.0
      %138 = vmatpush1.msra.mxu0 0.0
      %139 = vmatprep.subr.mxu0 0.0
      %140 = vmatpush1.msra.mxu0 0.0
      %141 = vmatprep.subr.mxu0 0.0
      %142 = vmatpush1.msra.mxu0 0.0
      %143 = vmatprep.subr.mxu0 0.0
      %144 = vmatpush1.msra.mxu0 0.0
      %145 = vmatprep.subr.mxu0 0.0
      %146 = vmatpush1.msra.mxu0 0.0
      %147 = vmatprep.subr.mxu0 0.0
      %148 = vmatpush1.msra.mxu0 0.0
      %149 = vmatprep.subr.mxu0 0.0
      %150 = vmatpush1.msra.mxu0 0.0
      %151 = vmatprep.mubr.f32.mxu0 0.0
      %v152 = vand.u32 %v43, 4294901760
      %v153 = vsub.f32 %v43, %v152
      %v154 = vand.u32 %v153, 4294901760
      %v155 = vsub.f32 %v153, %v154
      %v156 = vand.u32 %v155, 4294901760
      %157 = vmatmul.mubr.f32.gmra.mrb[0].mxu0 %v156
      %v158 = vpop.f32.mrb[0].mxu0
      %v159 = vadd.f32 0.0, %v158
      %v160 = vpop.f32.mrb[0].mxu0
      %161 = vdwg.mxu0
      %162 = vmatprep.subr.mxu0 0.0
      %v163 = vand.u32 %v54, 4294901760
      %v164 = vsub.f32 %v54, %v163
      %v165 = vand.u32 %v164, 4294901760
      %v166 = vsub.f32 %v164, %v165
      %v167 = vand.u32 %v166, 4294901760
      %168 = vmatpush1.msra.mxu0 %v167
      %169 = vmatprep.subr.mxu0 0.0
      %v170 = vand.u32 %v55, 4294901760
      %v171 = vsub.f32 %v55, %v170
      %v172 = vand.u32 %v171, 4294901760
      %v173 = vsub.f32 %v171, %v172
      %v174 = vand.u32 %v173, 4294901760
      %175 = vmatpush1.msra.mxu0 %v174
      %176 = vmatprep.subr.mxu0 0.0
      %v177 = vand.u32 %v56, 4294901760
      %v178 = vsub.f32 %v56, %v177
      %v179 = vand.u32 %v178, 4294901760
      %v180 = vsub.f32 %v178, %v179
      %v181 = vand.u32 %v180, 4294901760
      %182 = vmatpush1.msra.mxu0 %v181
      %183 = vmatprep.subr.mxu0 0.0
      %v184 = vand.u32 %v57, 4294901760
      %v185 = vsub.f32 %v57, %v184
      %v186 = vand.u32 %v185, 4294901760
      %v187 = vsub.f32 %v185, %v186
      %v188 = vand.u32 %v187, 4294901760
      %189 = vmatpush1.msra.mxu0 %v188
      %190 = vmatprep.subr.mxu0 0.0
      %v191 = vand.u32 %v58, 4294901760
      %v192 = vsub.f32 %v58, %v191
      %v193 = vand.u32 %v192, 4294901760
      %v194 = vsub.f32 %v192, %v193
      %v195 = vand.u32 %v194, 4294901760
      %196 = vmatpush1.msra.mxu0 %v195
      %197 = vmatprep.subr.mxu0 0.0
      %v198 = vand.u32 %v59, 4294901760
      %v199 = vsub.f32 %v59, %v198
      %v200 = vand.u32 %v199, 4294901760
      %v201 = vsub.f32 %v199, %v200
      %v202 = vand.u32 %v201, 4294901760
      %203 = vmatpush1.msra.mxu0 %v202
      %204 = vmatprep.subr.mxu0 0.0
      %v205 = vand.u32 %v60, 4294901760
      %v206 = vsub.f32 %v60, %v205
      %v207 = vand.u32 %v206, 4294901760
      %v208 = vsub.f32 %v206, %v207
      %v209 = vand.u32 %v208, 4294901760
      %210 = vmatpush1.msra.mxu0 %v209
      %211 = vmatprep.subr.mxu0 0.0
      %v212 = vand.u32 %v61, 4294901760
      %v213 = vsub.f32 %v61, %v212
      %v214 = vand.u32 %v213, 4294901760
      %v215 = vsub.f32 %v213, %v214
      %v216 = vand.u32 %v215, 4294901760
      %217 = vmatpush1.msra.mxu0 %v216
      %218 = vmatprep.subr.mxu0 0.0
      %v219 = vand.u32 %v62, 4294901760
      %v220 = vsub.f32 %v62, %v219
      %v221 = vand.u32 %v220, 4294901760
      %v222 = vsub.f32 %v220, %v221
      %v223 = vand.u32 %v222, 4294901760
      %224 = vmatpush1.msra.mxu0 %v223
      %225 = vmatprep.subr.mxu0 0.0
      %v226 = vand.u32 %v63, 4294901760
      %v227 = vsub.f32 %v63, %v226
      %v228 = vand.u32 %v227, 4294901760
      %v229 = vsub.f32 %v227, %v228
      %v230 = vand.u32 %v229, 4294901760
      %231 = vmatpush1.msra.mxu0 %v230
      %232 = vmatprep.subr.mxu0 0.0
      %v233 = vand.u32 %v64, 4294901760
      %v234 = vsub.f32 %v64, %v233
      %v235 = vand.u32 %v234, 4294901760
      %v236 = vsub.f32 %v234, %v235
      %v237 = vand.u32 %v236, 4294901760
      %238 = vmatpush1.msra.mxu0 %v237
      %239 = vmatprep.subr.mxu0 0.0
      %v240 = vand.u32 %v65, 4294901760
      %v241 = vsub.f32 %v65, %v240
      %v242 = vand.u32 %v241, 4294901760
      %v243 = vsub.f32 %v241, %v242
      %v244 = vand.u32 %v243, 4294901760
      %245 = vmatpush1.msra.mxu0 %v244
      %246 = vmatprep.subr.mxu0 0.0
      %v247 = vand.u32 %v66, 4294901760
      %v248 = vsub.f32 %v66, %v247
      %v249 = vand.u32 %v248, 4294901760
      %v250 = vsub.f32 %v248, %v249
      %v251 = vand.u32 %v250, 4294901760
      %252 = vmatpush1.msra.mxu0 %v251
      %253 = vmatprep.subr.mxu0 0.0
      %v254 = vand.u32 %v67, 4294901760
      %v255 = vsub.f32 %v67, %v254
      %v256 = vand.u32 %v255, 4294901760
      %v257 = vsub.f32 %v255, %v256
      %v258 = vand.u32 %v257, 4294901760
      %259 = vmatpush1.msra.mxu0 %v258
      %260 = vmatprep.subr.mxu0 0.0
      %v261 = vand.u32 %v68, 4294901760
      %v262 = vsub.f32 %v68, %v261
      %v263 = vand.u32 %v262, 4294901760
      %v264 = vsub.f32 %v262, %v263
      %v265 = vand.u32 %v264, 4294901760
      %266 = vmatpush1.msra.mxu0 %v265
      %267 = vmatprep.subr.mxu0 0.0
      %v268 = vand.u32 %v69, 4294901760
      %v269 = vsub.f32 %v69, %v268
      %v270 = vand.u32 %v269, 4294901760
      %v271 = vsub.f32 %v269, %v270
      %v272 = vand.u32 %v271, 4294901760
      %273 = vmatpush1.msra.mxu0 %v272
      %274 = vmatprep.subr.mxu0 0.0
      %275 = vmatpush1.msra.mxu0 0.0
      %276 = vmatprep.subr.mxu0 0.0
      %277 = vmatpush1.msra.mxu0 0.0
      %278 = vmatprep.subr.mxu0 0.0
      %279 = vmatpush1.msra.mxu0 0.0
      %280 = vmatprep.subr.mxu0 0.0
      %281 = vmatpush1.msra.mxu0 0.0
      %282 = vmatprep.subr.mxu0 0.0
      %283 = vmatpush1.msra.mxu0 0.0
      %284 = vmatprep.subr.mxu0 0.0
      %285 = vmatpush1.msra.mxu0 0.0
      %286 = vmatprep.subr.mxu0 0.0
      %287 = vmatpush1.msra.mxu0 0.0
      %288 = vmatprep.subr.mxu0 0.0
      %289 = vmatpush1.msra.mxu0 0.0
      %290 = vmatprep.subr.mxu0 0.0
      %291 = vmatpush1.msra.mxu0 0.0
      %292 = vmatprep.subr.mxu0 0.0
      %293 = vmatpush1.msra.mxu0 0.0
      %294 = vmatprep.subr.mxu0 0.0
      %295 = vmatpush1.msra.mxu0 0.0
      %296 = vmatprep.subr.mxu0 0.0
      %297 = vmatpush1.msra.mxu0 0.0
      %298 = vmatprep.subr.mxu0 0.0
      %299 = vmatpush1.msra.mxu0 0.0
      %300 = vmatprep.subr.mxu0 0.0
      %301 = vmatpush1.msra.mxu0 0.0
      %302 = vmatprep.subr.mxu0 0.0
      %303 = vmatpush1.msra.mxu0 0.0
      %304 = vmatprep.subr.mxu0 0.0
      %305 = vmatpush1.msra.mxu0 0.0
      %306 = vmatprep.mubr.f32.mxu0 0.0
      %v307 = vand.u32 %v43, 4294901760
      %308 = vmatmul.mubr.f32.gmra.mrb[0].mxu0 %v307
      %v309 = vpop.f32.mrb[0].mxu0
      %v310 = vadd.f32 %v159, %v309
      %v311 = vpop.f32.mrb[0].mxu0
      %312 = vdwg.mxu0
      %313 = vmatprep.subr.mxu0 0.0
      %v314 = vand.u32 %v54, 4294901760
      %v315 = vsub.f32 %v54, %v314
      %316 = vmatpush1.msra.mxu0 %v315
      %317 = vmatprep.subr.mxu0 0.0
      %v318 = vand.u32 %v55, 4294901760
      %v319 = vsub.f32 %v55, %v318
      %320 = vmatpush1.msra.mxu0 %v319
      %321 = vmatprep.subr.mxu0 0.0
      %v322 = vand.u32 %v56, 4294901760
      %v323 = vsub.f32 %v56, %v322
      %324 = vmatpush1.msra.mxu0 %v323
      %325 = vmatprep.subr.mxu0 0.0
      %v326 = vand.u32 %v57, 4294901760
      %v327 = vsub.f32 %v57, %v326
      %328 = vmatpush1.msra.mxu0 %v327
      %329 = vmatprep.subr.mxu0 0.0
      %v330 = vand.u32 %v58, 4294901760
      %v331 = vsub.f32 %v58, %v330
      %332 = vmatpush1.msra.mxu0 %v331
      %333 = vmatprep.subr.mxu0 0.0
      %v334 = vand.u32 %v59, 4294901760
      %v335 = vsub.f32 %v59, %v334
      %336 = vmatpush1.msra.mxu0 %v335
      %337 = vmatprep.subr.mxu0 0.0
      %v338 = vand.u32 %v60, 4294901760
      %v339 = vsub.f32 %v60, %v338
      %340 = vmatpush1.msra.mxu0 %v339
      %341 = vmatprep.subr.mxu0 0.0
      %v342 = vand.u32 %v61, 4294901760
      %v343 = vsub.f32 %v61, %v342
      %344 = vmatpush1.msra.mxu0 %v343
      %345 = vmatprep.subr.mxu0 0.0
      %v346 = vand.u32 %v62, 4294901760
      %v347 = vsub.f32 %v62, %v346
      %348 = vmatpush1.msra.mxu0 %v347
      %349 = vmatprep.subr.mxu0 0.0
      %v350 = vand.u32 %v63, 4294901760
      %v351 = vsub.f32 %v63, %v350
      %352 = vmatpush1.msra.mxu0 %v351
      %353 = vmatprep.subr.mxu0 0.0
      %v354 = vand.u32 %v64, 4294901760
      %v355 = vsub.f32 %v64, %v354
      %356 = vmatpush1.msra.mxu0 %v355
      %357 = vmatprep.subr.mxu0 0.0
      %v358 = vand.u32 %v65, 4294901760
      %v359 = vsub.f32 %v65, %v358
      %360 = vmatpush1.msra.mxu0 %v359
      %361 = vmatprep.subr.mxu0 0.0
      %v362 = vand.u32 %v66, 4294901760
      %v363 = vsub.f32 %v66, %v362
      %364 = vmatpush1.msra.mxu0 %v363
      %365 = vmatprep.subr.mxu0 0.0
      %v366 = vand.u32 %v67, 4294901760
      %v367 = vsub.f32 %v67, %v366
      %368 = vmatpush1.msra.mxu0 %v367
      %369 = vmatprep.subr.mxu0 0.0
      %v370 = vand.u32 %v68, 4294901760
      %v371 = vsub.f32 %v68, %v370
      %372 = vmatpush1.msra.mxu0 %v371
      %373 = vmatprep.subr.mxu0 0.0
      %v374 = vand.u32 %v69, 4294901760
      %v375 = vsub.f32 %v69, %v374
      %376 = vmatpush1.msra.mxu0 %v375
      %377 = vmatprep.subr.mxu0 0.0
      %378 = vmatpush1.msra.mxu0 0.0
      %379 = vmatprep.subr.mxu0 0.0
      %380 = vmatpush1.msra.mxu0 0.0
      %381 = vmatprep.subr.mxu0 0.0
      %382 = vmatpush1.msra.mxu0 0.0
      %383 = vmatprep.subr.mxu0 0.0
      %384 = vmatpush1.msra.mxu0 0.0
      %385 = vmatprep.subr.mxu0 0.0
      %386 = vmatpush1.msra.mxu0 0.0
      %387 = vmatprep.subr.mxu0 0.0
      %388 = vmatpush1.msra.mxu0 0.0
      %389 = vmatprep.subr.mxu0 0.0
      %390 = vmatpush1.msra.mxu0 0.0
      %391 = vmatprep.subr.mxu0 0.0
      %392 = vmatpush1.msra.mxu0 0.0
      %393 = vmatprep.subr.mxu0 0.0
      %394 = vmatpush1.msra.mxu0 0.0
      %395 = vmatprep.subr.mxu0 0.0
      %396 = vmatpush1.msra.mxu0 0.0
      %397 = vmatprep.subr.mxu0 0.0
      %398 = vmatpush1.msra.mxu0 0.0
      %399 = vmatprep.subr.mxu0 0.0
      %400 = vmatpush1.msra.mxu0 0.0
      %401 = vmatprep.subr.mxu0 0.0
      %402 = vmatpush1.msra.mxu0 0.0
      %403 = vmatprep.subr.mxu0 0.0
      %404 = vmatpush1.msra.mxu0 0.0
      %405 = vmatprep.subr.mxu0 0.0
      %406 = vmatpush1.msra.mxu0 0.0
      %407 = vmatprep.subr.mxu0 0.0
      %408 = vmatpush1.msra.mxu0 0.0
      %409 = vmatprep.mubr.f32.mxu0 0.0
      %v410 = vand.u32 %v43, 4294901760
      %v411 = vsub.f32 %v43, %v410
      %412 = vmatmul.mubr.f32.gmra.mrb[0].mxu0 %v411
      %v413 = vpop.f32.mrb[0].mxu0
      %v414 = vadd.f32 %v310, %v413
      %v415 = vpop.f32.mrb[0].mxu0
      %416 = vdwg.mxu0
      %417 = vmatprep.subr.mxu0 0.0
      %v418 = vand.u32 %v54, 4294901760
      %419 = vmatpush1.msra.mxu0 %v418
      %420 = vmatprep.subr.mxu0 0.0
      %v421 = vand.u32 %v55, 4294901760
      %422 = vmatpush1.msra.mxu0 %v421
      %423 = vmatprep.subr.mxu0 0.0
      %v424 = vand.u32 %v56, 4294901760
      %425 = vmatpush1.msra.mxu0 %v424
      %426 = vmatprep.subr.mxu0 0.0
      %v427 = vand.u32 %v57, 4294901760
      %428 = vmatpush1.msra.mxu0 %v427
      %429 = vmatprep.subr.mxu0 0.0
      %v430 = vand.u32 %v58, 4294901760
      %431 = vmatpush1.msra.mxu0 %v430
      %432 = vmatprep.subr.mxu0 0.0
      %v433 = vand.u32 %v59, 4294901760
      %434 = vmatpush1.msra.mxu0 %v433
      %435 = vmatprep.subr.mxu0 0.0
      %v436 = vand.u32 %v60, 4294901760
      %437 = vmatpush1.msra.mxu0 %v436
      %438 = vmatprep.subr.mxu0 0.0
      %v439 = vand.u32 %v61, 4294901760
      %440 = vmatpush1.msra.mxu0 %v439
      %441 = vmatprep.subr.mxu0 0.0
      %v442 = vand.u32 %v62, 4294901760
      %443 = vmatpush1.msra.mxu0 %v442
      %444 = vmatprep.subr.mxu0 0.0
      %v445 = vand.u32 %v63, 4294901760
      %446 = vmatpush1.msra.mxu0 %v445
      %447 = vmatprep.subr.mxu0 0.0
      %v448 = vand.u32 %v64, 4294901760
      %449 = vmatpush1.msra.mxu0 %v448
      %450 = vmatprep.subr.mxu0 0.0
      %v451 = vand.u32 %v65, 4294901760
      %452 = vmatpush1.msra.mxu0 %v451
      %453 = vmatprep.subr.mxu0 0.0
      %v454 = vand.u32 %v66, 4294901760
      %455 = vmatpush1.msra.mxu0 %v454
      %456 = vmatprep.subr.mxu0 0.0
      %v457 = vand.u32 %v67, 4294901760
      %458 = vmatpush1.msra.mxu0 %v457
      %459 = vmatprep.subr.mxu0 0.0
      %v460 = vand.u32 %v68, 4294901760
      %461 = vmatpush1.msra.mxu0 %v460
      %462 = vmatprep.subr.mxu0 0.0
      %v463 = vand.u32 %v69, 4294901760
      %464 = vmatpush1.msra.mxu0 %v463
      %465 = vmatprep.subr.mxu0 0.0
      %466 = vmatpush1.msra.mxu0 0.0
      %467 = vmatprep.subr.mxu0 0.0
      %468 = vmatpush1.msra.mxu0 0.0
      %469 = vmatprep.subr.mxu0 0.0
      %470 = vmatpush1.msra.mxu0 0.0
      %471 = vmatprep.subr.mxu0 0.0
      %472 = vmatpush1.msra.mxu0 0.0
      %473 = vmatprep.subr.mxu0 0.0
      %474 = vmatpush1.msra.mxu0 0.0
      %475 = vmatprep.subr.mxu0 0.0
      %476 = vmatpush1.msra.mxu0 0.0
      %477 = vmatprep.subr.mxu0 0.0
      %478 = vmatpush1.msra.mxu0 0.0
      %479 = vmatprep.subr.mxu0 0.0
      %480 = vmatpush1.msra.mxu0 0.0
      %481 = vmatprep.subr.mxu0 0.0
      %482 = vmatpush1.msra.mxu0 0.0
      %483 = vmatprep.subr.mxu0 0.0
      %484 = vmatpush1.msra.mxu0 0.0
      %485 = vmatprep.subr.mxu0 0.0
      %486 = vmatpush1.msra.mxu0 0.0
      %487 = vmatprep.subr.mxu0 0.0
      %488 = vmatpush1.msra.mxu0 0.0
      %489 = vmatprep.subr.mxu0 0.0
      %490 = vmatpush1.msra.mxu0 0.0
      %491 = vmatprep.subr.mxu0 0.0
      %492 = vmatpush1.msra.mxu0 0.0
      %493 = vmatprep.subr.mxu0 0.0
      %494 = vmatpush1.msra.mxu0 0.0
      %495 = vmatprep.subr.mxu0 0.0
      %496 = vmatpush1.msra.mxu0 0.0
      %497 = vmatprep.mubr.f32.mxu0 0.0
      %v498 = vand.u32 %v43, 4294901760
      %v499 = vsub.f32 %v43, %v498
      %v500 = vand.u32 %v499, 4294901760
      %501 = vmatmul.mubr.f32.gmra.mrb[0].mxu0 %v500
      %v502 = vpop.f32.mrb[0].mxu0
      %v503 = vadd.f32 %v414, %v502
      %v504 = vpop.f32.mrb[0].mxu0
      %505 = vdwg.mxu0
      %506 = vmatprep.subr.mxu0 0.0
      %v507 = vand.u32 %v54, 4294901760
      %v508 = vsub.f32 %v54, %v507
      %v509 = vand.u32 %v508, 4294901760
      %510 = vmatpush1.msra.mxu0 %v509
      %511 = vmatprep.subr.mxu0 0.0
      %v512 = vand.u32 %v55, 4294901760
      %v513 = vsub.f32 %v55, %v512
      %v514 = vand.u32 %v513, 4294901760
      %515 = vmatpush1.msra.mxu0 %v514
      %516 = vmatprep.subr.mxu0 0.0
      %v517 = vand.u32 %v56, 4294901760
      %v518 = vsub.f32 %v56, %v517
      %v519 = vand.u32 %v518, 4294901760
      %520 = vmatpush1.msra.mxu0 %v519
      %521 = vmatprep.subr.mxu0 0.0
      %v522 = vand.u32 %v57, 4294901760
      %v523 = vsub.f32 %v57, %v522
      %v524 = vand.u32 %v523, 4294901760
      %525 = vmatpush1.msra.mxu0 %v524
      %526 = vmatprep.subr.mxu0 0.0
      %v527 = vand.u32 %v58, 4294901760
      %v528 = vsub.f32 %v58, %v527
      %v529 = vand.u32 %v528, 4294901760
      %530 = vmatpush1.msra.mxu0 %v529
      %531 = vmatprep.subr.mxu0 0.0
      %v532 = vand.u32 %v59, 4294901760
      %v533 = vsub.f32 %v59, %v532
      %v534 = vand.u32 %v533, 4294901760
      %535 = vmatpush1.msra.mxu0 %v534
      %536 = vmatprep.subr.mxu0 0.0
      %v537 = vand.u32 %v60, 4294901760
      %v538 = vsub.f32 %v60, %v537
      %v539 = vand.u32 %v538, 4294901760
      %540 = vmatpush1.msra.mxu0 %v539
      %541 = vmatprep.subr.mxu0 0.0
      %v542 = vand.u32 %v61, 4294901760
      %v543 = vsub.f32 %v61, %v542
      %v544 = vand.u32 %v543, 4294901760
      %545 = vmatpush1.msra.mxu0 %v544
      %546 = vmatprep.subr.mxu0 0.0
      %v547 = vand.u32 %v62, 4294901760
      %v548 = vsub.f32 %v62, %v547
      %v549 = vand.u32 %v548, 4294901760
      %550 = vmatpush1.msra.mxu0 %v549
      %551 = vmatprep.subr.mxu0 0.0
      %v552 = vand.u32 %v63, 4294901760
      %v553 = vsub.f32 %v63, %v552
      %v554 = vand.u32 %v553, 4294901760
      %555 = vmatpush1.msra.mxu0 %v554
      %556 = vmatprep.subr.mxu0 0.0
      %v557 = vand.u32 %v64, 4294901760
      %v558 = vsub.f32 %v64, %v557
      %v559 = vand.u32 %v558, 4294901760
      %560 = vmatpush1.msra.mxu0 %v559
      %561 = vmatprep.subr.mxu0 0.0
      %v562 = vand.u32 %v65, 4294901760
      %v563 = vsub.f32 %v65, %v562
      %v564 = vand.u32 %v563, 4294901760
      %565 = vmatpush1.msra.mxu0 %v564
      %566 = vmatprep.subr.mxu0 0.0
      %v567 = vand.u32 %v66, 4294901760
      %v568 = vsub.f32 %v66, %v567
      %v569 = vand.u32 %v568, 4294901760
      %570 = vmatpush1.msra.mxu0 %v569
      %571 = vmatprep.subr.mxu0 0.0
      %v572 = vand.u32 %v67, 4294901760
      %v573 = vsub.f32 %v67, %v572
      %v574 = vand.u32 %v573, 4294901760
      %575 = vmatpush1.msra.mxu0 %v574
      %576 = vmatprep.subr.mxu0 0.0
      %v577 = vand.u32 %v68, 4294901760
      %v578 = vsub.f32 %v68, %v577
      %v579 = vand.u32 %v578, 4294901760
      %580 = vmatpush1.msra.mxu0 %v579
      %581 = vmatprep.subr.mxu0 0.0
      %v582 = vand.u32 %v69, 4294901760
      %v583 = vsub.f32 %v69, %v582
      %v584 = vand.u32 %v583, 4294901760
      %585 = vmatpush1.msra.mxu0 %v584
      %586 = vmatprep.subr.mxu0 0.0
      %587 = vmatpush1.msra.mxu0 0.0
      %588 = vmatprep.subr.mxu0 0.0
      %589 = vmatpush1.msra.mxu0 0.0
      %590 = vmatprep.subr.mxu0 0.0
      %591 = vmatpush1.msra.mxu0 0.0
      %592 = vmatprep.subr.mxu0 0.0
      %593 = vmatpush1.msra.mxu0 0.0
      %594 = vmatprep.subr.mxu0 0.0
      %595 = vmatpush1.msra.mxu0 0.0
      %596 = vmatprep.subr.mxu0 0.0
      %597 = vmatpush1.msra.mxu0 0.0
      %598 = vmatprep.subr.mxu0 0.0
      %599 = vmatpush1.msra.mxu0 0.0
      %600 = vmatprep.subr.mxu0 0.0
      %601 = vmatpush1.msra.mxu0 0.0
      %602 = vmatprep.subr.mxu0 0.0
      %603 = vmatpush1.msra.mxu0 0.0
      %604 = vmatprep.subr.mxu0 0.0
      %605 = vmatpush1.msra.mxu0 0.0
      %606 = vmatprep.subr.mxu0 0.0
      %607 = vmatpush1.msra.mxu0 0.0
      %608 = vmatprep.subr.mxu0 0.0
      %609 = vmatpush1.msra.mxu0 0.0
      %610 = vmatprep.subr.mxu0 0.0
      %611 = vmatpush1.msra.mxu0 0.0
      %612 = vmatprep.subr.mxu0 0.0
      %613 = vmatpush1.msra.mxu0 0.0
      %614 = vmatprep.subr.mxu0 0.0
      %615 = vmatpush1.msra.mxu0 0.0
      %616 = vmatprep.subr.mxu0 0.0
      %617 = vmatpush1.msra.mxu0 0.0
      %618 = vmatprep.mubr.f32.mxu0 0.0
      %v619 = vand.u32 %v43, 4294901760
      %620 = vmatmul.mubr.f32.gmra.mrb[0].mxu0 %v619
      %v621 = vpop.f32.mrb[0].mxu0
      %v622 = vadd.f32 %v503, %v621
      %v623 = vpop.f32.mrb[0].mxu0
      %624 = vdwg.mxu0
      %625 = vmatprep.subr.mxu0 0.0
      %v626 = vand.u32 %v54, 4294901760
      %627 = vmatpush1.msra.mxu0 %v626
      %628 = vmatprep.subr.mxu0 0.0
      %v629 = vand.u32 %v55, 4294901760
      %630 = vmatpush1.msra.mxu0 %v629
      %631 = vmatprep.subr.mxu0 0.0
      %v632 = vand.u32 %v56, 4294901760
      %633 = vmatpush1.msra.mxu0 %v632
      %634 = vmatprep.subr.mxu0 0.0
      %v635 = vand.u32 %v57, 4294901760
      %636 = vmatpush1.msra.mxu0 %v635
      %637 = vmatprep.subr.mxu0 0.0
      %v638 = vand.u32 %v58, 4294901760
      %639 = vmatpush1.msra.mxu0 %v638
      %640 = vmatprep.subr.mxu0 0.0
      %v641 = vand.u32 %v59, 4294901760
      %642 = vmatpush1.msra.mxu0 %v641
      %643 = vmatprep.subr.mxu0 0.0
      %v644 = vand.u32 %v60, 4294901760
      %645 = vmatpush1.msra.mxu0 %v644
      %646 = vmatprep.subr.mxu0 0.0
      %v647 = vand.u32 %v61, 4294901760
      %648 = vmatpush1.msra.mxu0 %v647
      %649 = vmatprep.subr.mxu0 0.0
      %v650 = vand.u32 %v62, 4294901760
      %651 = vmatpush1.msra.mxu0 %v650
      %652 = vmatprep.subr.mxu0 0.0
      %v653 = vand.u32 %v63, 4294901760
      %654 = vmatpush1.msra.mxu0 %v653
      %655 = vmatprep.subr.mxu0 0.0
      %v656 = vand.u32 %v64, 4294901760
      %657 = vmatpush1.msra.mxu0 %v656
      %658 = vmatprep.subr.mxu0 0.0
      %v659 = vand.u32 %v65, 4294901760
      %660 = vmatpush1.msra.mxu0 %v659
      %661 = vmatprep.subr.mxu0 0.0
      %v662 = vand.u32 %v66, 4294901760
      %663 = vmatpush1.msra.mxu0 %v662
      %664 = vmatprep.subr.mxu0 0.0
      %v665 = vand.u32 %v67, 4294901760
      %666 = vmatpush1.msra.mxu0 %v665
      %667 = vmatprep.subr.mxu0 0.0
      %v668 = vand.u32 %v68, 4294901760
      %669 = vmatpush1.msra.mxu0 %v668
      %670 = vmatprep.subr.mxu0 0.0
      %v671 = vand.u32 %v69, 4294901760
      %672 = vmatpush1.msra.mxu0 %v671
      %673 = vmatprep.subr.mxu0 0.0
      %674 = vmatpush1.msra.mxu0 0.0
      %675 = vmatprep.subr.mxu0 0.0
      %676 = vmatpush1.msra.mxu0 0.0
      %677 = vmatprep.subr.mxu0 0.0
      %678 = vmatpush1.msra.mxu0 0.0
      %679 = vmatprep.subr.mxu0 0.0
      %680 = vmatpush1.msra.mxu0 0.0
      %681 = vmatprep.subr.mxu0 0.0
      %682 = vmatpush1.msra.mxu0 0.0
      %683 = vmatprep.subr.mxu0 0.0
      %684 = vmatpush1.msra.mxu0 0.0
      %685 = vmatprep.subr.mxu0 0.0
      %686 = vmatpush1.msra.mxu0 0.0
      %687 = vmatprep.subr.mxu0 0.0
      %688 = vmatpush1.msra.mxu0 0.0
      %689 = vmatprep.subr.mxu0 0.0
      %690 = vmatpush1.msra.mxu0 0.0
      %691 = vmatprep.subr.mxu0 0.0
      %692 = vmatpush1.msra.mxu0 0.0
      %693 = vmatprep.subr.mxu0 0.0
      %694 = vmatpush1.msra.mxu0 0.0
      %695 = vmatprep.subr.mxu0 0.0
      %696 = vmatpush1.msra.mxu0 0.0
      %697 = vmatprep.subr.mxu0 0.0
      %698 = vmatpush1.msra.mxu0 0.0
      %699 = vmatprep.subr.mxu0 0.0
      %700 = vmatpush1.msra.mxu0 0.0
      %701 = vmatprep.subr.mxu0 0.0
      %702 = vmatpush1.msra.mxu0 0.0
      %703 = vmatprep.subr.mxu0 0.0
      %704 = vmatpush1.msra.mxu0 0.0
      %705 = vmatprep.mubr.f32.mxu0 0.0
      %v706 = vand.u32 %v43, 4294901760
      %707 = vmatmul.mubr.f32.gmra.mrb[0].mxu0 %v706
      %v708 = vpop.f32.mrb[0].mxu0
      %v709 = vadd.f32 %v622, %v708
      %v710 = vpop.f32.mrb[0].mxu0
      %711 = vdwg.mxu0
      %v712 = vadd.f32 %v70, %v709
      %vm713 = vcmask 261120
      %714 = vst.msk [vmem:[#allocation2] sm:$0xff] %vm713, %v712
    $region21: #{tpu_custom_call.1} parent=1 // pred_fallthru
      _
    // Predicated region
    $region22: #{tpu_custom_call.1} parent=1 // pred_check
      %p715 = pneg %p26
    $region23: #{tpu_custom_call.1} parent=1 // pred_check_branch
      %717 = sbr.rel (%p715) target = $region25
    $region24: #{tpu_custom_call.1} parent=1 // pred_region
      %s718 = smul.u32 0, 128
      %v719 = vadd.s32 %v36, 8
      %v720 = vadd.s32 %v36, 16
      %v721 = vadd.s32 %v36, 24
      %v722 = vadd.s32 %v36, 32
      %v723 = vadd.s32 %v36, 40
      %v724 = vadd.s32 %v36, 48
      %v725 = vadd.s32 %v36, 56
      %v726 = vadd.s32 %v36, 64
      %v727 = vadd.s32 %v36, 72
      %v728 = vadd.s32 %v36, 80
      %v729 = vadd.s32 %v36, 88
      %v730 = vadd.s32 %v36, 96
      %v731 = vadd.s32 %v36, 104
      %v732 = vadd.s32 %v36, 112
      %v733 = vadd.s32 %v36, 120
      %v734 = vstv %s718
      %v735 = vadd.s32 %v734, %v36
      %v736 = vadd.s32 %v734, %v719
      %v737 = vadd.s32 %v734, %v720
      %v738 = vadd.s32 %v734, %v721
      %v739 = vadd.s32 %v734, %v722
      %v740 = vadd.s32 %v734, %v723
      %v741 = vadd.s32 %v734, %v724
      %v742 = vadd.s32 %v734, %v725
      %v743 = vadd.s32 %v734, %v726
      %v744 = vadd.s32 %v734, %v727
      %v745 = vadd.s32 %v734, %v728
      %v746 = vadd.s32 %v734, %v729
      %v747 = vadd.s32 %v734, %v730
      %v748 = vadd.s32 %v734, %v731
      %v749 = vadd.s32 %v734, %v732
      %v750 = vadd.s32 %v734, %v733
      %vm751 = vcmp.lt.s32.totalorder %v735, 20
      %vm752 = vcmp.lt.s32.totalorder %v736, 20
      %vm753 = vcmp.lt.s32.totalorder %v737, 20
      %vm754 = vcmp.lt.s32.totalorder %v738, 20
      %vm755 = vcmp.lt.s32.totalorder %v739, 20
      %vm756 = vcmp.lt.s32.totalorder %v740, 20
      %vm757 = vcmp.lt.s32.totalorder %v741, 20
      %vm758 = vcmp.lt.s32.totalorder %v742, 20
      %vm759 = vcmp.lt.s32.totalorder %v743, 20
      %vm760 = vcmp.lt.s32.totalorder %v744, 20
      %vm761 = vcmp.lt.s32.totalorder %v745, 20
      %vm762 = vcmp.lt.s32.totalorder %v746, 20
      %vm763 = vcmp.lt.s32.totalorder %v747, 20
      %vm764 = vcmp.lt.s32.totalorder %v748, 20
      %vm765 = vcmp.lt.s32.totalorder %v749, 20
      %vm766 = vcmp.lt.s32.totalorder %v750, 20
      %v767 = vld [vmem:[#allocation4] sm:$0xff]
      %v768 = vld [vmem:[#allocation4 + $0x8] sm:$0xff]
      %v769 = vld [vmem:[#allocation4 + $0x10] sm:$0xff]
      %v770 = vld [vmem:[#allocation4 + $0x18] sm:$0xff]
      %v771 = vld [vmem:[#allocation4 + $0x20] sm:$0xff]
      %v772 = vld [vmem:[#allocation4 + $0x28] sm:$0xff]
      %v773 = vld [vmem:[#allocation4 + $0x30] sm:$0xff]
      %v774 = vld [vmem:[#allocation4 + $0x38] sm:$0xff]
      %v775 = vld [vmem:[#allocation4 + $0x40] sm:$0xff]
      %v776 = vld [vmem:[#allocation4 + $0x48] sm:$0xff]
      %v777 = vld [vmem:[#allocation4 + $0x50] sm:$0xff]
      %v778 = vld [vmem:[#allocation4 + $0x58] sm:$0xff]
      %v779 = vld [vmem:[#allocation4 + $0x60] sm:$0xff]
      %v780 = vld [vmem:[#allocation4 + $0x68] sm:$0xff]
      %v781 = vld [vmem:[#allocation4 + $0x70] sm:$0xff]
      %v782 = vld [vmem:[#allocation4 + $0x78] sm:$0xff]
      %v783 = vsel %vm751, 1, 0
      %v784 = vsel %vm752, 1, 0
      %v785 = vsel %vm753, 1, 0
      %v786 = vsel %vm754, 1, 0
      %v787 = vsel %vm755, 1, 0
      %v788 = vsel %vm756, 1, 0
      %v789 = vsel %vm757, 1, 0
      %v790 = vsel %vm758, 1, 0
      %v791 = vsel %vm759, 1, 0
      %v792 = vsel %vm760, 1, 0
      %v793 = vsel %vm761, 1, 0
      %v794 = vsel %vm762, 1, 0
      %v795 = vsel %vm763, 1, 0
      %v796 = vsel %vm764, 1, 0
      %v797 = vsel %vm765, 1, 0
      %v798 = vsel %vm766, 1, 0
      %vm799 = vcmp.eq.s32.totalorder %v783, 1
      %vm800 = vcmp.eq.s32.totalorder %v784, 1
      %vm801 = vcmp.eq.s32.totalorder %v785, 1
      %vm802 = vcmp.eq.s32.totalorder %v786, 1
      %vm803 = vcmp.eq.s32.totalorder %v787, 1
      %vm804 = vcmp.eq.s32.totalorder %v788, 1
      %vm805 = vcmp.eq.s32.totalorder %v789, 1
      %vm806 = vcmp.eq.s32.totalorder %v790, 1
      %vm807 = vcmp.eq.s32.totalorder %v791, 1
      %vm808 = vcmp.eq.s32.totalorder %v792, 1
      %vm809 = vcmp.eq.s32.totalorder %v793, 1
      %vm810 = vcmp.eq.s32.totalorder %v794, 1
      %vm811 = vcmp.eq.s32.totalorder %v795, 1
      %vm812 = vcmp.eq.s32.totalorder %v796, 1
      %vm813 = vcmp.eq.s32.totalorder %v797, 1
      %vm814 = vcmp.eq.s32.totalorder %v798, 1
      %v815 = vsel %vm799, %v767, 0.0
      %v816 = vsel %vm800, %v768, 0.0
      %v817 = vsel %vm801, %v769, 0.0
      %v818 = vsel %vm802, %v770, 0.0
      %v819 = vsel %vm803, %v771, 0.0
      %v820 = vsel %vm804, %v772, 0.0
      %v821 = vsel %vm805, %v773, 0.0
      %v822 = vsel %vm806, %v774, 0.0
      %v823 = vsel %vm807, %v775, 0.0
      %v824 = vsel %vm808, %v776, 0.0
      %v825 = vsel %vm809, %v777, 0.0
      %v826 = vsel %vm810, %v778, 0.0
      %v827 = vsel %vm811, %v779, 0.0
      %v828 = vsel %vm812, %v780, 0.0
      %v829 = vsel %vm813, %v781, 0.0
      %v830 = vsel %vm814, %v782, 0.0
      %v831 = vld [vmem:[#allocation2] sm:$0xff]
      %832 = vmatprep.subr.mxu0 0.0
      %v833 = vand.u32 %v815, 4294901760
      %834 = vmatpush1.msra.mxu0 %v833
      %835 = vmatprep.subr.mxu0 0.0
      %v836 = vand.u32 %v816, 4294901760
      %837 = vmatpush1.msra.mxu0 %v836
      %838 = vmatprep.subr.mxu0 0.0
      %v839 = vand.u32 %v817, 4294901760
      %840 = vmatpush1.msra.mxu0 %v839
      %841 = vmatprep.subr.mxu0 0.0
      %v842 = vand.u32 %v818, 4294901760
      %843 = vmatpush1.msra.mxu0 %v842
      %844 = vmatprep.subr.mxu0 0.0
      %v845 = vand.u32 %v819, 4294901760
      %846 = vmatpush1.msra.mxu0 %v845
      %847 = vmatprep.subr.mxu0 0.0
      %v848 = vand.u32 %v820, 4294901760
      %849 = vmatpush1.msra.mxu0 %v848
      %850 = vmatprep.subr.mxu0 0.0
      %v851 = vand.u32 %v821, 4294901760
      %852 = vmatpush1.msra.mxu0 %v851
      %853 = vmatprep.subr.mxu0 0.0
      %v854 = vand.u32 %v822, 4294901760
      %855 = vmatpush1.msra.mxu0 %v854
      %856 = vmatprep.subr.mxu0 0.0
      %v857 = vand.u32 %v823, 4294901760
      %858 = vmatpush1.msra.mxu0 %v857
      %859 = vmatprep.subr.mxu0 0.0
      %v860 = vand.u32 %v824, 4294901760
      %861 = vmatpush1.msra.mxu0 %v860
      %862 = vmatprep.subr.mxu0 0.0
      %v863 = vand.u32 %v825, 4294901760
      %864 = vmatpush1.msra.mxu0 %v863
      %865 = vmatprep.subr.mxu0 0.0
      %v866 = vand.u32 %v826, 4294901760
      %867 = vmatpush1.msra.mxu0 %v866
      %868 = vmatprep.subr.mxu0 0.0
      %v869 = vand.u32 %v827, 4294901760
      %870 = vmatpush1.msra.mxu0 %v869
      %871 = vmatprep.subr.mxu0 0.0
      %v872 = vand.u32 %v828, 4294901760
      %873 = vmatpush1.msra.mxu0 %v872
      %874 = vmatprep.subr.mxu0 0.0
      %v875 = vand.u32 %v829, 4294901760
      %876 = vmatpush1.msra.mxu0 %v875
      %877 = vmatprep.subr.mxu0 0.0
      %v878 = vand.u32 %v830, 4294901760
      %879 = vmatpush1.msra.mxu0 %v878
      %880 = vmatprep.subr.mxu0 0.0
      %881 = vmatpush1.msra.mxu0 0.0
      %882 = vmatprep.subr.mxu0 0.0
      %883 = vmatpush1.msra.mxu0 0.0
      %884 = vmatprep.subr.mxu0 0.0
      %885 = vmatpush1.msra.mxu0 0.0
      %886 = vmatprep.subr.mxu0 0.0
      %887 = vmatpush1.msra.mxu0 0.0
      %888 = vmatprep.subr.mxu0 0.0
      %889 = vmatpush1.msra.mxu0 0.0
      %890 = vmatprep.subr.mxu0 0.0
      %891 = vmatpush1.msra.mxu0 0.0
      %892 = vmatprep.subr.mxu0 0.0
      %893 = vmatpush1.msra.mxu0 0.0
      %894 = vmatprep.subr.mxu0 0.0
      %895 = vmatpush1.msra.mxu0 0.0
      %896 = vmatprep.subr.mxu0 0.0
      %897 = vmatpush1.msra.mxu0 0.0
      %898 = vmatprep.subr.mxu0 0.0
      %899 = vmatpush1.msra.mxu0 0.0
      %900 = vmatprep.subr.mxu0 0.0
      %901 = vmatpush1.msra.mxu0 0.0
      %902 = vmatprep.subr.mxu0 0.0
      %903 = vmatpush1.msra.mxu0 0.0
      %904 = vmatprep.subr.mxu0 0.0
      %905 = vmatpush1.msra.mxu0 0.0
      %906 = vmatprep.subr.mxu0 0.0
      %907 = vmatpush1.msra.mxu0 0.0
      %908 = vmatprep.subr.mxu0 0.0
      %909 = vmatpush1.msra.mxu0 0.0
      %910 = vmatprep.subr.mxu0 0.0
      %911 = vmatpush1.msra.mxu0 0.0
      %912 = vmatprep.mubr.f32.mxu0 0.0
      %v913 = vand.u32 %v43, 4294901760
      %v914 = vsub.f32 %v43, %v913
      %v915 = vand.u32 %v914, 4294901760
      %v916 = vsub.f32 %v914, %v915
      %v917 = vand.u32 %v916, 4294901760
      %918 = vmatmul.mubr.f32.gmra.mrb[0].mxu0 %v917
      %v919 = vpop.f32.mrb[0].mxu0
      %v920 = vadd.f32 0.0, %v919
      %v921 = vpop.f32.mrb[0].mxu0
      %922 = vdwg.mxu0
      %923 = vmatprep.subr.mxu0 0.0
      %v924 = vand.u32 %v815, 4294901760
      %v925 = vsub.f32 %v815, %v924
      %v926 = vand.u32 %v925, 4294901760
      %v927 = vsub.f32 %v925, %v926
      %v928 = vand.u32 %v927, 4294901760
      %929 = vmatpush1.msra.mxu0 %v928
      %930 = vmatprep.subr.mxu0 0.0
      %v931 = vand.u32 %v816, 4294901760
      %v932 = vsub.f32 %v816, %v931
      %v933 = vand.u32 %v932, 4294901760
      %v934 = vsub.f32 %v932, %v933
      %v935 = vand.u32 %v934, 4294901760
      %936 = vmatpush1.msra.mxu0 %v935
      %937 = vmatprep.subr.mxu0 0.0
      %v938 = vand.u32 %v817, 4294901760
      %v939 = vsub.f32 %v817, %v938
      %v940 = vand.u32 %v939, 4294901760
      %v941 = vsub.f32 %v939, %v940
      %v942 = vand.u32 %v941, 4294901760
      %943 = vmatpush1.msra.mxu0 %v942
      %944 = vmatprep.subr.mxu0 0.0
      %v945 = vand.u32 %v818, 4294901760
      %v946 = vsub.f32 %v818, %v945
      %v947 = vand.u32 %v946, 4294901760
      %v948 = vsub.f32 %v946, %v947
      %v949 = vand.u32 %v948, 4294901760
      %950 = vmatpush1.msra.mxu0 %v949
      %951 = vmatprep.subr.mxu0 0.0
      %v952 = vand.u32 %v819, 4294901760
      %v953 = vsub.f32 %v819, %v952
      %v954 = vand.u32 %v953, 4294901760
      %v955 = vsub.f32 %v953, %v954
      %v956 = vand.u32 %v955, 4294901760
      %957 = vmatpush1.msra.mxu0 %v956
      %958 = vmatprep.subr.mxu0 0.0
      %v959 = vand.u32 %v820, 4294901760
      %v960 = vsub.f32 %v820, %v959
      %v961 = vand.u32 %v960, 4294901760
      %v962 = vsub.f32 %v960, %v961
      %v963 = vand.u32 %v962, 4294901760
      %964 = vmatpush1.msra.mxu0 %v963
      %965 = vmatprep.subr.mxu0 0.0
      %v966 = vand.u32 %v821, 4294901760
      %v967 = vsub.f32 %v821, %v966
      %v968 = vand.u32 %v967, 4294901760
      %v969 = vsub.f32 %v967, %v968
      %v970 = vand.u32 %v969, 4294901760
      %971 = vmatpush1.msra.mxu0 %v970
      %972 = vmatprep.subr.mxu0 0.0
      %v973 = vand.u32 %v822, 4294901760
      %v974 = vsub.f32 %v822, %v973
      %v975 = vand.u32 %v974, 4294901760
      %v976 = vsub.f32 %v974, %v975
      %v977 = vand.u32 %v976, 4294901760
      %978 = vmatpush1.msra.mxu0 %v977
      %979 = vmatprep.subr.mxu0 0.0
      %v980 = vand.u32 %v823, 4294901760
      %v981 = vsub.f32 %v823, %v980
      %v982 = vand.u32 %v981, 4294901760
      %v983 = vsub.f32 %v981, %v982
      %v984 = vand.u32 %v983, 4294901760
      %985 = vmatpush1.msra.mxu0 %v984
      %986 = vmatprep.subr.mxu0 0.0
      %v987 = vand.u32 %v824, 4294901760
      %v988 = vsub.f32 %v824, %v987
      %v989 = vand.u32 %v988, 4294901760
      %v990 = vsub.f32 %v988, %v989
      %v991 = vand.u32 %v990, 4294901760
      %992 = vmatpush1.msra.mxu0 %v991
      %993 = vmatprep.subr.mxu0 0.0
      %v994 = vand.u32 %v825, 4294901760
      %v995 = vsub.f32 %v825, %v994
      %v996 = vand.u32 %v995, 4294901760
      %v997 = vsub.f32 %v995, %v996
      %v998 = vand.u32 %v997, 4294901760
      %999 = vmatpush1.msra.mxu0 %v998
      %1000 = vmatprep.subr.mxu0 0.0
      %v1001 = vand.u32 %v826, 4294901760
      %v1002 = vsub.f32 %v826, %v1001
      %v1003 = vand.u32 %v1002, 4294901760
      %v1004 = vsub.f32 %v1002, %v1003
      %v1005 = vand.u32 %v1004, 4294901760
      %1006 = vmatpush1.msra.mxu0 %v1005
      %1007 = vmatprep.subr.mxu0 0.0
      %v1008 = vand.u32 %v827, 4294901760
      %v1009 = vsub.f32 %v827, %v1008
      %v1010 = vand.u32 %v1009, 4294901760
      %v1011 = vsub.f32 %v1009, %v1010
      %v1012 = vand.u32 %v1011, 4294901760
      %1013 = vmatpush1.msra.mxu0 %v1012
      %1014 = vmatprep.subr.mxu0 0.0
      %v1015 = vand.u32 %v828, 4294901760
      %v1016 = vsub.f32 %v828, %v1015
      %v1017 = vand.u32 %v1016, 4294901760
      %v1018 = vsub.f32 %v1016, %v1017
      %v1019 = vand.u32 %v1018, 4294901760
      %1020 = vmatpush1.msra.mxu0 %v1019
      %1021 = vmatprep.subr.mxu0 0.0
      %v1022 = vand.u32 %v829, 4294901760
      %v1023 = vsub.f32 %v829, %v1022
      %v1024 = vand.u32 %v1023, 4294901760
      %v1025 = vsub.f32 %v1023, %v1024
      %v1026 = vand.u32 %v1025, 4294901760
      %1027 = vmatpush1.msra.mxu0 %v1026
      %1028 = vmatprep.subr.mxu0 0.0
      %v1029 = vand.u32 %v830, 4294901760
      %v1030 = vsub.f32 %v830, %v1029
      %v1031 = vand.u32 %v1030, 4294901760
      %v1032 = vsub.f32 %v1030, %v1031
      %v1033 = vand.u32 %v1032, 4294901760
      %1034 = vmatpush1.msra.mxu0 %v1033
      %1035 = vmatprep.subr.mxu0 0.0
      %1036 = vmatpush1.msra.mxu0 0.0
      %1037 = vmatprep.subr.mxu0 0.0
      %1038 = vmatpush1.msra.mxu0 0.0
      %1039 = vmatprep.subr.mxu0 0.0
      %1040 = vmatpush1.msra.mxu0 0.0
      %1041 = vmatprep.subr.mxu0 0.0
      %1042 = vmatpush1.msra.mxu0 0.0
      %1043 = vmatprep.subr.mxu0 0.0
      %1044 = vmatpush1.msra.mxu0 0.0
      %1045 = vmatprep.subr.mxu0 0.0
      %1046 = vmatpush1.msra.mxu0 0.0
      %1047 = vmatprep.subr.mxu0 0.0
      %1048 = vmatpush1.msra.mxu0 0.0
      %1049 = vmatprep.subr.mxu0 0.0
      %1050 = vmatpush1.msra.mxu0 0.0
      %1051 = vmatprep.subr.mxu0 0.0
      %1052 = vmatpush1.msra.mxu0 0.0
      %1053 = vmatprep.subr.mxu0 0.0
      %1054 = vmatpush1.msra.mxu0 0.0
      %1055 = vmatprep.subr.mxu0 0.0
      %1056 = vmatpush1.msra.mxu0 0.0
      %1057 = vmatprep.subr.mxu0 0.0
      %1058 = vmatpush1.msra.mxu0 0.0
      %1059 = vmatprep.subr.mxu0 0.0
      %1060 = vmatpush1.msra.mxu0 0.0
      %1061 = vmatprep.subr.mxu0 0.0
      %1062 = vmatpush1.msra.mxu0 0.0
      %1063 = vmatprep.subr.mxu0 0.0
      %1064 = vmatpush1.msra.mxu0 0.0
      %1065 = vmatprep.subr.mxu0 0.0
      %1066 = vmatpush1.msra.mxu0 0.0
      %1067 = vmatprep.mubr.f32.mxu0 0.0
      %v1068 = vand.u32 %v43, 4294901760
      %1069 = vmatmul.mubr.f32.gmra.mrb[0].mxu0 %v1068
      %v1070 = vpop.f32.mrb[0].mxu0
      %v1071 = vadd.f32 %v920, %v1070
      %v1072 = vpop.f32.mrb[0].mxu0
      %1073 = vdwg.mxu0
      %1074 = vmatprep.subr.mxu0 0.0
      %v1075 = vand.u32 %v815, 4294901760
      %v1076 = vsub.f32 %v815, %v1075
      %1077 = vmatpush1.msra.mxu0 %v1076
      %1078 = vmatprep.subr.mxu0 0.0
      %v1079 = vand.u32 %v816, 4294901760
      %v1080 = vsub.f32 %v816, %v1079
      %1081 = vmatpush1.msra.mxu0 %v1080
      %1082 = vmatprep.subr.mxu0 0.0
      %v1083 = vand.u32 %v817, 4294901760
      %v1084 = vsub.f32 %v817, %v1083
      %1085 = vmatpush1.msra.mxu0 %v1084
      %1086 = vmatprep.subr.mxu0 0.0
      %v1087 = vand.u32 %v818, 4294901760
      %v1088 = vsub.f32 %v818, %v1087
      %1089 = vmatpush1.msra.mxu0 %v1088
      %1090 = vmatprep.subr.mxu0 0.0
      %v1091 = vand.u32 %v819, 4294901760
      %v1092 = vsub.f32 %v819, %v1091
      %1093 = vmatpush1.msra.mxu0 %v1092
      %1094 = vmatprep.subr.mxu0 0.0
      %v1095 = vand.u32 %v820, 4294901760
      %v1096 = vsub.f32 %v820, %v1095
      %1097 = vmatpush1.msra.mxu0 %v1096
      %1098 = vmatprep.subr.mxu0 0.0
      %v1099 = vand.u32 %v821, 4294901760
      %v1100 = vsub.f32 %v821, %v1099
      %1101 = vmatpush1.msra.mxu0 %v1100
      %1102 = vmatprep.subr.mxu0 0.0
      %v1103 = vand.u32 %v822, 4294901760
      %v1104 = vsub.f32 %v822, %v1103
      %1105 = vmatpush1.msra.mxu0 %v1104
      %1106 = vmatprep.subr.mxu0 0.0
      %v1107 = vand.u32 %v823, 4294901760
      %v1108 = vsub.f32 %v823, %v1107
      %1109 = vmatpush1.msra.mxu0 %v1108
      %1110 = vmatprep.subr.mxu0 0.0
      %v1111 = vand.u32 %v824, 4294901760
      %v1112 = vsub.f32 %v824, %v1111
      %1113 = vmatpush1.msra.mxu0 %v1112
      %1114 = vmatprep.subr.mxu0 0.0
      %v1115 = vand.u32 %v825, 4294901760
      %v1116 = vsub.f32 %v825, %v1115
      %1117 = vmatpush1.msra.mxu0 %v1116
      %1118 = vmatprep.subr.mxu0 0.0
      %v1119 = vand.u32 %v826, 4294901760
      %v1120 = vsub.f32 %v826, %v1119
      %1121 = vmatpush1.msra.mxu0 %v1120
      %1122 = vmatprep.subr.mxu0 0.0
      %v1123 = vand.u32 %v827, 4294901760
      %v1124 = vsub.f32 %v827, %v1123
      %1125 = vmatpush1.msra.mxu0 %v1124
      %1126 = vmatprep.subr.mxu0 0.0
      %v1127 = vand.u32 %v828, 4294901760
      %v1128 = vsub.f32 %v828, %v1127
      %1129 = vmatpush1.msra.mxu0 %v1128
      %1130 = vmatprep.subr.mxu0 0.0
      %v1131 = vand.u32 %v829, 4294901760
      %v1132 = vsub.f32 %v829, %v1131
      %1133 = vmatpush1.msra.mxu0 %v1132
      %1134 = vmatprep.subr.mxu0 0.0
      %v1135 = vand.u32 %v830, 4294901760
      %v1136 = vsub.f32 %v830, %v1135
      %1137 = vmatpush1.msra.mxu0 %v1136
      %1138 = vmatprep.subr.mxu0 0.0
      %1139 = vmatpush1.msra.mxu0 0.0
      %1140 = vmatprep.subr.mxu0 0.0
      %1141 = vmatpush1.msra.mxu0 0.0
      %1142 = vmatprep.subr.mxu0 0.0
      %1143 = vmatpush1.msra.mxu0 0.0
      %1144 = vmatprep.subr.mxu0 0.0
      %1145 = vmatpush1.msra.mxu0 0.0
      %1146 = vmatprep.subr.mxu0 0.0
      %1147 = vmatpush1.msra.mxu0 0.0
      %1148 = vmatprep.subr.mxu0 0.0
      %1149 = vmatpush1.msra.mxu0 0.0
      %1150 = vmatprep.subr.mxu0 0.0
      %1151 = vmatpush1.msra.mxu0 0.0
      %1152 = vmatprep.subr.mxu0 0.0
      %1153 = vmatpush1.msra.mxu0 0.0
      %1154 = vmatprep.subr.mxu0 0.0
      %1155 = vmatpush1.msra.mxu0 0.0
      %1156 = vmatprep.subr.mxu0 0.0
      %1157 = vmatpush1.msra.mxu0 0.0
      %1158 = vmatprep.subr.mxu0 0.0
      %1159 = vmatpush1.msra.mxu0 0.0
      %1160 = vmatprep.subr.mxu0 0.0
      %1161 = vmatpush1.msra.mxu0 0.0
      %1162 = vmatprep.subr.mxu0 0.0
      %1163 = vmatpush1.msra.mxu0 0.0
      %1164 = vmatprep.subr.mxu0 0.0
      %1165 = vmatpush1.msra.mxu0 0.0
      %1166 = vmatprep.subr.mxu0 0.0
      %1167 = vmatpush1.msra.mxu0 0.0
      %1168 = vmatprep.subr.mxu0 0.0
      %1169 = vmatpush1.msra.mxu0 0.0
      %1170 = vmatprep.mubr.f32.mxu0 0.0
      %v1171 = vand.u32 %v43, 4294901760
      %v1172 = vsub.f32 %v43, %v1171
      %1173 = vmatmul.mubr.f32.gmra.mrb[0].mxu0 %v1172
      %v1174 = vpop.f32.mrb[0].mxu0
      %v1175 = vadd.f32 %v1071, %v1174
      %v1176 = vpop.f32.mrb[0].mxu0
      %1177 = vdwg.mxu0
      %1178 = vmatprep.subr.mxu0 0.0
      %v1179 = vand.u32 %v815, 4294901760
      %1180 = vmatpush1.msra.mxu0 %v1179
      %1181 = vmatprep.subr.mxu0 0.0
      %v1182 = vand.u32 %v816, 4294901760
      %1183 = vmatpush1.msra.mxu0 %v1182
      %1184 = vmatprep.subr.mxu0 0.0
      %v1185 = vand.u32 %v817, 4294901760
      %1186 = vmatpush1.msra.mxu0 %v1185
      %1187 = vmatprep.subr.mxu0 0.0
      %v1188 = vand.u32 %v818, 4294901760
      %1189 = vmatpush1.msra.mxu0 %v1188
      %1190 = vmatprep.subr.mxu0 0.0
      %v1191 = vand.u32 %v819, 4294901760
      %1192 = vmatpush1.msra.mxu0 %v1191
      %1193 = vmatprep.subr.mxu0 0.0
      %v1194 = vand.u32 %v820, 4294901760
      %1195 = vmatpush1.msra.mxu0 %v1194
      %1196 = vmatprep.subr.mxu0 0.0
      %v1197 = vand.u32 %v821, 4294901760
      %1198 = vmatpush1.msra.mxu0 %v1197
      %1199 = vmatprep.subr.mxu0 0.0
      %v1200 = vand.u32 %v822, 4294901760
      %1201 = vmatpush1.msra.mxu0 %v1200
      %1202 = vmatprep.subr.mxu0 0.0
      %v1203 = vand.u32 %v823, 4294901760
      %1204 = vmatpush1.msra.mxu0 %v1203
      %1205 = vmatprep.subr.mxu0 0.0
      %v1206 = vand.u32 %v824, 4294901760
      %1207 = vmatpush1.msra.mxu0 %v1206
      %1208 = vmatprep.subr.mxu0 0.0
      %v1209 = vand.u32 %v825, 4294901760
      %1210 = vmatpush1.msra.mxu0 %v1209
      %1211 = vmatprep.subr.mxu0 0.0
      %v1212 = vand.u32 %v826, 4294901760
      %1213 = vmatpush1.msra.mxu0 %v1212
      %1214 = vmatprep.subr.mxu0 0.0
      %v1215 = vand.u32 %v827, 4294901760
      %1216 = vmatpush1.msra.mxu0 %v1215
      %1217 = vmatprep.subr.mxu0 0.0
      %v1218 = vand.u32 %v828, 4294901760
      %1219 = vmatpush1.msra.mxu0 %v1218
      %1220 = vmatprep.subr.mxu0 0.0
      %v1221 = vand.u32 %v829, 4294901760
      %1222 = vmatpush1.msra.mxu0 %v1221
      %1223 = vmatprep.subr.mxu0 0.0
      %v1224 = vand.u32 %v830, 4294901760
      %1225 = vmatpush1.msra.mxu0 %v1224
      %1226 = vmatprep.subr.mxu0 0.0
      %1227 = vmatpush1.msra.mxu0 0.0
      %1228 = vmatprep.subr.mxu0 0.0
      %1229 = vmatpush1.msra.mxu0 0.0
      %1230 = vmatprep.subr.mxu0 0.0
      %1231 = vmatpush1.msra.mxu0 0.0
      %1232 = vmatprep.subr.mxu0 0.0
      %1233 = vmatpush1.msra.mxu0 0.0
      %1234 = vmatprep.subr.mxu0 0.0
      %1235 = vmatpush1.msra.mxu0 0.0
      %1236 = vmatprep.subr.mxu0 0.0
      %1237 = vmatpush1.msra.mxu0 0.0
      %1238 = vmatprep.subr.mxu0 0.0
      %1239 = vmatpush1.msra.mxu0 0.0
      %1240 = vmatprep.subr.mxu0 0.0
      %1241 = vmatpush1.msra.mxu0 0.0
      %1242 = vmatprep.subr.mxu0 0.0
      %1243 = vmatpush1.msra.mxu0 0.0
      %1244 = vmatprep.subr.mxu0 0.0
      %1245 = vmatpush1.msra.mxu0 0.0
      %1246 = vmatprep.subr.mxu0 0.0
      %1247 = vmatpush1.msra.mxu0 0.0
      %1248 = vmatprep.subr.mxu0 0.0
      %1249 = vmatpush1.msra.mxu0 0.0
      %1250 = vmatprep.subr.mxu0 0.0
      %1251 = vmatpush1.msra.mxu0 0.0
      %1252 = vmatprep.subr.mxu0 0.0
      %1253 = vmatpush1.msra.mxu0 0.0
      %1254 = vmatprep.subr.mxu0 0.0
      %1255 = vmatpush1.msra.mxu0 0.0
      %1256 = vmatprep.subr.mxu0 0.0
      %1257 = vmatpush1.msra.mxu0 0.0
      %1258 = vmatprep.mubr.f32.mxu0 0.0
      %v1259 = vand.u32 %v43, 4294901760
      %v1260 = vsub.f32 %v43, %v1259
      %v1261 = vand.u32 %v1260, 4294901760
      %1262 = vmatmul.mubr.f32.gmra.mrb[0].mxu0 %v1261
      %v1263 = vpop.f32.mrb[0].mxu0
      %v1264 = vadd.f32 %v1175, %v1263
      %v1265 = vpop.f32.mrb[0].mxu0
      %1266 = vdwg.mxu0
      %1267 = vmatprep.subr.mxu0 0.0
      %v1268 = vand.u32 %v815, 4294901760
      %v1269 = vsub.f32 %v815, %v1268
      %v1270 = vand.u32 %v1269, 4294901760
      %1271 = vmatpush1.msra.mxu0 %v1270
      %1272 = vmatprep.subr.mxu0 0.0
      %v1273 = vand.u32 %v816, 4294901760
      %v1274 = vsub.f32 %v816, %v1273
      %v1275 = vand.u32 %v1274, 4294901760
      %1276 = vmatpush1.msra.mxu0 %v1275
      %1277 = vmatprep.subr.mxu0 0.0
      %v1278 = vand.u32 %v817, 4294901760
      %v1279 = vsub.f32 %v817, %v1278
      %v1280 = vand.u32 %v1279, 4294901760
      %1281 = vmatpush1.msra.mxu0 %v1280
      %1282 = vmatprep.subr.mxu0 0.0
      %v1283 = vand.u32 %v818, 4294901760
      %v1284 = vsub.f32 %v818, %v1283
      %v1285 = vand.u32 %v1284, 4294901760
      %1286 = vmatpush1.msra.mxu0 %v1285
      %1287 = vmatprep.subr.mxu0 0.0
      %v1288 = vand.u32 %v819, 4294901760
      %v1289 = vsub.f32 %v819, %v1288
      %v1290 = vand.u32 %v1289, 4294901760
      %1291 = vmatpush1.msra.mxu0 %v1290
      %1292 = vmatprep.subr.mxu0 0.0
      %v1293 = vand.u32 %v820, 4294901760
      %v1294 = vsub.f32 %v820, %v1293
      %v1295 = vand.u32 %v1294, 4294901760
      %1296 = vmatpush1.msra.mxu0 %v1295
      %1297 = vmatprep.subr.mxu0 0.0
      %v1298 = vand.u32 %v821, 4294901760
      %v1299 = vsub.f32 %v821, %v1298
      %v1300 = vand.u32 %v1299, 4294901760
      %1301 = vmatpush1.msra.mxu0 %v1300
      %1302 = vmatprep.subr.mxu0 0.0
      %v1303 = vand.u32 %v822, 4294901760
      %v1304 = vsub.f32 %v822, %v1303
      %v1305 = vand.u32 %v1304, 4294901760
      %1306 = vmatpush1.msra.mxu0 %v1305
      %1307 = vmatprep.subr.mxu0 0.0
      %v1308 = vand.u32 %v823, 4294901760
      %v1309 = vsub.f32 %v823, %v1308
      %v1310 = vand.u32 %v1309, 4294901760
      %1311 = vmatpush1.msra.mxu0 %v1310
      %1312 = vmatprep.subr.mxu0 0.0
      %v1313 = vand.u32 %v824, 4294901760
      %v1314 = vsub.f32 %v824, %v1313
      %v1315 = vand.u32 %v1314, 4294901760
      %1316 = vmatpush1.msra.mxu0 %v1315
      %1317 = vmatprep.subr.mxu0 0.0
      %v1318 = vand.u32 %v825, 4294901760
      %v1319 = vsub.f32 %v825, %v1318
      %v1320 = vand.u32 %v1319, 4294901760
      %1321 = vmatpush1.msra.mxu0 %v1320
      %1322 = vmatprep.subr.mxu0 0.0
      %v1323 = vand.u32 %v826, 4294901760
      %v1324 = vsub.f32 %v826, %v1323
      %v1325 = vand.u32 %v1324, 4294901760
      %1326 = vmatpush1.msra.mxu0 %v1325
      %1327 = vmatprep.subr.mxu0 0.0
      %v1328 = vand.u32 %v827, 4294901760
      %v1329 = vsub.f32 %v827, %v1328
      %v1330 = vand.u32 %v1329, 4294901760
      %1331 = vmatpush1.msra.mxu0 %v1330
      %1332 = vmatprep.subr.mxu0 0.0
      %v1333 = vand.u32 %v828, 4294901760
      %v1334 = vsub.f32 %v828, %v1333
      %v1335 = vand.u32 %v1334, 4294901760
      %1336 = vmatpush1.msra.mxu0 %v1335
      %1337 = vmatprep.subr.mxu0 0.0
      %v1338 = vand.u32 %v829, 4294901760
      %v1339 = vsub.f32 %v829, %v1338
      %v1340 = vand.u32 %v1339, 4294901760
      %1341 = vmatpush1.msra.mxu0 %v1340
      %1342 = vmatprep.subr.mxu0 0.0
      %v1343 = vand.u32 %v830, 4294901760
      %v1344 = vsub.f32 %v830, %v1343
      %v1345 = vand.u32 %v1344, 4294901760
      %1346 = vmatpush1.msra.mxu0 %v1345
      %1347 = vmatprep.subr.mxu0 0.0
      %1348 = vmatpush1.msra.mxu0 0.0
      %1349 = vmatprep.subr.mxu0 0.0
      %1350 = vmatpush1.msra.mxu0 0.0
      %1351 = vmatprep.subr.mxu0 0.0
      %1352 = vmatpush1.msra.mxu0 0.0
      %1353 = vmatprep.subr.mxu0 0.0
      %1354 = vmatpush1.msra.mxu0 0.0
      %1355 = vmatprep.subr.mxu0 0.0
      %1356 = vmatpush1.msra.mxu0 0.0
      %1357 = vmatprep.subr.mxu0 0.0
      %1358 = vmatpush1.msra.mxu0 0.0
      %1359 = vmatprep.subr.mxu0 0.0
      %1360 = vmatpush1.msra.mxu0 0.0
      %1361 = vmatprep.subr.mxu0 0.0
      %1362 = vmatpush1.msra.mxu0 0.0
      %1363 = vmatprep.subr.mxu0 0.0
      %1364 = vmatpush1.msra.mxu0 0.0
      %1365 = vmatprep.subr.mxu0 0.0
      %1366 = vmatpush1.msra.mxu0 0.0
      %1367 = vmatprep.subr.mxu0 0.0
      %1368 = vmatpush1.msra.mxu0 0.0
      %1369 = vmatprep.subr.mxu0 0.0
      %1370 = vmatpush1.msra.mxu0 0.0
      %1371 = vmatprep.subr.mxu0 0.0
      %1372 = vmatpush1.msra.mxu0 0.0
      %1373 = vmatprep.subr.mxu0 0.0
      %1374 = vmatpush1.msra.mxu0 0.0
      %1375 = vmatprep.subr.mxu0 0.0
      %1376 = vmatpush1.msra.mxu0 0.0
      %1377 = vmatprep.subr.mxu0 0.0
      %1378 = vmatpush1.msra.mxu0 0.0
      %1379 = vmatprep.mubr.f32.mxu0 0.0
      %v1380 = vand.u32 %v43, 4294901760
      %1381 = vmatmul.mubr.f32.gmra.mrb[0].mxu0 %v1380
      %v1382 = vpop.f32.mrb[0].mxu0
      %v1383 = vadd.f32 %v1264, %v1382
      %v1384 = vpop.f32.mrb[0].mxu0
      %1385 = vdwg.mxu0
      %1386 = vmatprep.subr.mxu0 0.0
      %v1387 = vand.u32 %v815, 4294901760
      %1388 = vmatpush1.msra.mxu0 %v1387
      %1389 = vmatprep.subr.mxu0 0.0
      %v1390 = vand.u32 %v816, 4294901760
      %1391 = vmatpush1.msra.mxu0 %v1390
      %1392 = vmatprep.subr.mxu0 0.0
      %v1393 = vand.u32 %v817, 4294901760
      %1394 = vmatpush1.msra.mxu0 %v1393
      %1395 = vmatprep.subr.mxu0 0.0
      %v1396 = vand.u32 %v818, 4294901760
      %1397 = vmatpush1.msra.mxu0 %v1396
      %1398 = vmatprep.subr.mxu0 0.0
      %v1399 = vand.u32 %v819, 4294901760
      %1400 = vmatpush1.msra.mxu0 %v1399
      %1401 = vmatprep.subr.mxu0 0.0
      %v1402 = vand.u32 %v820, 4294901760
      %1403 = vmatpush1.msra.mxu0 %v1402
      %1404 = vmatprep.subr.mxu0 0.0
      %v1405 = vand.u32 %v821, 4294901760
      %1406 = vmatpush1.msra.mxu0 %v1405
      %1407 = vmatprep.subr.mxu0 0.0
      %v1408 = vand.u32 %v822, 4294901760
      %1409 = vmatpush1.msra.mxu0 %v1408
      %1410 = vmatprep.subr.mxu0 0.0
      %v1411 = vand.u32 %v823, 4294901760
      %1412 = vmatpush1.msra.mxu0 %v1411
      %1413 = vmatprep.subr.mxu0 0.0
      %v1414 = vand.u32 %v824, 4294901760
      %1415 = vmatpush1.msra.mxu0 %v1414
      %1416 = vmatprep.subr.mxu0 0.0
      %v1417 = vand.u32 %v825, 4294901760
      %1418 = vmatpush1.msra.mxu0 %v1417
      %1419 = vmatprep.subr.mxu0 0.0
      %v1420 = vand.u32 %v826, 4294901760
      %1421 = vmatpush1.msra.mxu0 %v1420
      %1422 = vmatprep.subr.mxu0 0.0
      %v1423 = vand.u32 %v827, 4294901760
      %1424 = vmatpush1.msra.mxu0 %v1423
      %1425 = vmatprep.subr.mxu0 0.0
      %v1426 = vand.u32 %v828, 4294901760
      %1427 = vmatpush1.msra.mxu0 %v1426
      %1428 = vmatprep.subr.mxu0 0.0
      %v1429 = vand.u32 %v829, 4294901760
      %1430 = vmatpush1.msra.mxu0 %v1429
      %1431 = vmatprep.subr.mxu0 0.0
      %v1432 = vand.u32 %v830, 4294901760
      %1433 = vmatpush1.msra.mxu0 %v1432
      %1434 = vmatprep.subr.mxu0 0.0
      %1435 = vmatpush1.msra.mxu0 0.0
      %1436 = vmatprep.subr.mxu0 0.0
      %1437 = vmatpush1.msra.mxu0 0.0
      %1438 = vmatprep.subr.mxu0 0.0
      %1439 = vmatpush1.msra.mxu0 0.0
      %1440 = vmatprep.subr.mxu0 0.0
      %1441 = vmatpush1.msra.mxu0 0.0
      %1442 = vmatprep.subr.mxu0 0.0
      %1443 = vmatpush1.msra.mxu0 0.0
      %1444 = vmatprep.subr.mxu0 0.0
      %1445 = vmatpush1.msra.mxu0 0.0
      %1446 = vmatprep.subr.mxu0 0.0
      %1447 = vmatpush1.msra.mxu0 0.0
      %1448 = vmatprep.subr.mxu0 0.0
      %1449 = vmatpush1.msra.mxu0 0.0
      %1450 = vmatprep.subr.mxu0 0.0
      %1451 = vmatpush1.msra.mxu0 0.0
      %1452 = vmatprep.subr.mxu0 0.0
      %1453 = vmatpush1.msra.mxu0 0.0
      %1454 = vmatprep.subr.mxu0 0.0
      %1455 = vmatpush1.msra.mxu0 0.0
      %1456 = vmatprep.subr.mxu0 0.0
      %1457 = vmatpush1.msra.mxu0 0.0
      %1458 = vmatprep.subr.mxu0 0.0
      %1459 = vmatpush1.msra.mxu0 0.0
      %1460 = vmatprep.subr.mxu0 0.0
      %1461 = vmatpush1.msra.mxu0 0.0
      %1462 = vmatprep.subr.mxu0 0.0
      %1463 = vmatpush1.msra.mxu0 0.0
      %1464 = vmatprep.subr.mxu0 0.0
      %1465 = vmatpush1.msra.mxu0 0.0
      %1466 = vmatprep.mubr.f32.mxu0 0.0
      %v1467 = vand.u32 %v43, 4294901760
      %1468 = vmatmul.mubr.f32.gmra.mrb[0].mxu0 %v1467
      %v1469 = vpop.f32.mrb[0].mxu0
      %v1470 = vadd.f32 %v1383, %v1469
      %v1471 = vpop.f32.mrb[0].mxu0
      %1472 = vdwg.mxu0
      %v1473 = vadd.f32 %v831, %v1470
      %vm1474 = vcmask 261120
      %1475 = vst.msk [vmem:[#allocation2] sm:$0xff] %vm1474, %v1473
      %v1476 = vld [vmem:[#allocation3] sm:$0xff]
      %v1477 = vmax.f32 %v1476, 1.0
      %v1478 = vld [vmem:[#allocation2] sm:$0xff]
      %1480 = vset.pattern.permute.xlu0 0
      %1481 = vperm.xlu0 %1480, %v1477
      %v1482 = vpop.permute.xlu0 %1481
      %v1484 = vrcp.pop %v1482
      %v1485 = vmul.f32 %v1478, %v1484
      %1486 = vst.msk [vmem:[#allocation7] sm:$0xff] %vm1474, %v1485
    $region25: #{tpu_custom_call.1} parent=1 // pred_fallthru
      _
    // Predicated region
    $region26: #{tpu_custom_call.1} parent=1 // pred_check
      _
    $region27: #{tpu_custom_call.1} parent=1 // pred_check_branch
      %1488 = sbr.rel (0) target = $region29
    $region28: #{tpu_custom_call.1} parent=1 // pred_region
      %s1490 = ssub.s32 128, 128
      %1491 = vsyncadd [#allocation6], %s1490
      %s1493 = sshll.u32 [#allocation7], 4
      %s1494 = int_to_ptr.vmem [resolvable:$true] %s1493
      %1496 = dma.vmem_to_hbm [thread:$0]  %s1494, 128, %s2, [#allocation6]
    $region29: #{tpu_custom_call.1} parent=1 // pred_fallthru
      _
    // Predicated region
    $region30: #{tpu_custom_call.1} parent=1 // pred_check
      _
    $region31: #{tpu_custom_call.1} parent=1 // pred_check_branch
      %1498 = sbr.rel (0) target = $region33
    $region32: #{tpu_custom_call.1} parent=1 // pred_region
      %1499 = dma.done [#allocation6], 128
    $region33: #{tpu_custom_call.1} parent=1 // pred_fallthru
      _
    %1500 = vsyncpa [#allocation5], 1
    %1501 = vsyncpa [#allocation6], 1

</llo_original>
